<compile_context>
chip_gen: v7x
topology: tpu7x:2x2x1
jax: 0.10.0
libtpu: 0.0.40
codegen_flags: <defaults>
</compile_context>

<pallas_src>
import functools

import jax
import jax.numpy as jnp
from jax.experimental import pallas as pl
from jax.experimental.pallas import tpu as pltpu


# ----------------------------- shared helpers -------------------------------

def _layernorm(y, gamma, beta, eps):
    mu = jnp.mean(y, axis=-1, keepdims=True)
    var = jnp.mean(jnp.square(y - mu), axis=-1, keepdims=True)
    return (y - mu) * jax.lax.rsqrt(var + eps) * gamma + beta


# ------------------------- fused encoder kernel ------------------------------

def _encoder_kernel(x_emb_ref, mask_ref, emb_g_ref, emb_b_ref,
                    wqkv_ref, bqkv_ref, wo_ref, bo_ref, ln1g_ref, ln1b_ref,
                    w1_ref, b1_ref, w2_ref, b2_ref, ln2g_ref, ln2b_ref,
                    poolw_ref, poolb_ref,
                    out_ref,
                    x_ref, ctx_ref,
                    *, B, S, NH, DH, scale, eps, n_layers):
    """One grid step == one transformer layer.

    x_ref (VMEM scratch) carries the hidden state across layers; the embedding
    LayerNorm runs only at layer 0 and the pooler only at the last layer.
    """
    H = NH * DH
    layer = pl.program_id(0)

    # ---- layer 0: fold the embedding LayerNorm; x stays in VMEM after this --
    @pl.when(layer == 0)
    def _():
        x_ref[...] = _layernorm(x_emb_ref[...], emb_g_ref[...], emb_b_ref[...],
                                eps)

    x = x_ref[...]                                               # (M, H) f32

    # ---- attention: fused QKV projection (bf16 MXU inputs, f32 accum) ------
    qkv = jnp.dot(x.astype(jnp.bfloat16), wqkv_ref[...],
                  preferred_element_type=jnp.float32) + bqkv_ref[...]  # (M,3H)

    mask = mask_ref[...]      # (M, M) additive: batch block-diag + key mask
    for h in range(NH):       # static tiny loop over heads (full batch per matmul)
        q = qkv[:, h * DH:(h + 1) * DH].astype(jnp.bfloat16)
        k = qkv[:, H + h * DH:H + (h + 1) * DH].astype(jnp.bfloat16)
        v = qkv[:, 2 * H + h * DH:2 * H + (h + 1) * DH].astype(jnp.bfloat16)
        s = jax.lax.dot_general(q, k, (((1,), (1,)), ((), ())),
                                preferred_element_type=jnp.float32)    # (M, M)
        s = s * scale + mask                       # f32 mask / softmax math
        s = s - jnp.max(s, axis=-1, keepdims=True)
        p = jnp.exp(s)
        p = p * pl.reciprocal(jnp.sum(p, axis=-1, keepdims=True), approx=True)
        # write this head's context straight into VMEM scratch (no concat)
        ctx_ref[:, h * DH:(h + 1) * DH] = jnp.dot(
            p.astype(jnp.bfloat16), v, preferred_element_type=jnp.float32)

    attn = jnp.dot(ctx_ref[...].astype(jnp.bfloat16), wo_ref[...],
                   preferred_element_type=jnp.float32) + bo_ref[...]
    y = _layernorm(attn + x, ln1g_ref[...], ln1b_ref[...], eps)

    # ---- FFN: w1 -> gelu -> w2 -> residual -> LayerNorm ---------------------
    hmid = jnp.dot(y.astype(jnp.bfloat16), w1_ref[...],
                   preferred_element_type=jnp.float32) + b1_ref[...]
    hmid = jax.nn.gelu(hmid, approximate=True)
    y2 = jnp.dot(hmid.astype(jnp.bfloat16), w2_ref[...],
                 preferred_element_type=jnp.float32) + b2_ref[...] + y
    y2 = _layernorm(y2, ln2g_ref[...], ln2b_ref[...], eps)
    x_ref[...] = y2                                              # carry to l+1

    # ---- last layer: fold the pooler (CLS gather + dense + tanh) ------------
    @pl.when(layer == n_layers - 1)
    def _():
        # B is tiny; static row slices (no strided-load relayout needed here).
        cls = jnp.concatenate([y2[b * S:b * S + 1, :] for b in range(B)],
                              axis=0)                            # (B, H)
        pooled = jnp.dot(cls.astype(jnp.bfloat16), poolw_ref[...],
                         preferred_element_type=jnp.float32) + poolb_ref[...]
        out_ref[...] = jnp.tanh(pooled).astype(out_ref.dtype)


def pallas_encoder(x_emb, mask_bd, packed, *, cfg, B, S):
    """Single pallas_call: embeddings-LN + L transformer layers + pooler."""
    L = cfg.num_layers
    H, NH, DH, I = cfg.hidden, cfg.num_heads, cfg.head_dim, cfg.intermediate
    M = B * S
    scale = 1.0 / (DH ** 0.5)

    def const_spec(shape):                       # whole-array, layer-invariant
        return pl.BlockSpec(shape, lambda l: (0, 0))

    def per_layer(shape):                        # stream layer l's weight slab
        return pl.BlockSpec((None,) + shape, lambda l: (l, 0, 0))

    kern = functools.partial(_encoder_kernel, B=B, S=S, NH=NH, DH=DH,
                             scale=scale, eps=cfg.ln_eps, n_layers=L)

    # TODO(synk): at real BERT sizes (H>=768, S>=512) add a row grid over
    # M=B*S (marked "parallel" for v7x's 2 TCs), size tiles per generation
    # (256 on v6e/v7x, 128 on v5e) and set vmem_limit_bytes for v7x's 64 MiB.
    return pl.pallas_call(
        kern,
        out_shape=jax.ShapeDtypeStruct((B, H), jnp.float32),
        grid_spec=pltpu.PrefetchScalarGridSpec(
            num_scalar_prefetch=0,
            grid=(L,),
            in_specs=[
                const_spec((M, H)),          # x_emb (pre-LN embeddings)
                const_spec((M, M)),          # block-diag additive mask
                const_spec((1, H)),          # emb_ln_g
                const_spec((1, H)),          # emb_ln_b
                per_layer((H, 3 * H)),       # wqkv (bf16)
                per_layer((1, 3 * H)),       # bqkv
                per_layer((H, H)),           # wo   (bf16)
                per_layer((1, H)),           # bo
                per_layer((1, H)),           # ln1_g
                per_layer((1, H)),           # ln1_b
                per_layer((H, I)),           # w1   (bf16)
                per_layer((1, I)),           # b1
                per_layer((I, H)),           # w2   (bf16)
                per_layer((1, H)),           # b2
                per_layer((1, H)),           # ln2_g
                per_layer((1, H)),           # ln2_b
                const_spec((H, H)),          # pooler_w (bf16)
                const_spec((1, H)),          # pooler_b
            ],
            out_specs=pl.BlockSpec((B, H), lambda l: (0, 0)),
            scratch_shapes=[pltpu.VMEM((M, H), jnp.float32),   # x (carried)
                            pltpu.VMEM((M, H), jnp.float32)],  # ctx
        ),
        compiler_params=pltpu.CompilerParams(
            dimension_semantics=("arbitrary",)),   # layer axis carries state
    )(x_emb, mask_bd,
      packed["emb_ln_g"], packed["emb_ln_b"],
      packed["wqkv"], packed["bqkv"], packed["wo"], packed["bo"],
      packed["ln1_g"], packed["ln1_b"],
      packed["w1"], packed["b1"], packed["w2"], packed["b2"],
      packed["ln2_g"], packed["ln2_b"],
      packed["pooler_w"], packed["pooler_b"])


# ----------------------------- Model definition -----------------------------

class Config:
    vocab_size = 128
    hidden = 128
    num_layers = 2
    num_heads = 2
    head_dim = 64          # num_heads * head_dim == hidden
    intermediate = 256
    max_pos = 16
    type_vocab = 2
    ln_eps = 1e-12


def init_params(cfg, key):
    def nrm(k, shape):
        return 0.02 * jax.random.normal(k, shape, dtype=jnp.float32)

    keys = iter(jax.random.split(key, 64))
    p = {
        "word_emb": nrm(next(keys), (cfg.vocab_size, cfg.hidden)),
        "pos_emb": nrm(next(keys), (cfg.max_pos, cfg.hidden)),
        "type_emb": nrm(next(keys), (cfg.type_vocab, cfg.hidden)),
        "emb_ln_g": jnp.ones((cfg.hidden,), jnp.float32),
        "emb_ln_b": jnp.zeros((cfg.hidden,), jnp.float32),
        "layers": [],
        "pooler_w": nrm(next(keys), (cfg.hidden, cfg.hidden)),
        "pooler_b": jnp.zeros((cfg.hidden,), jnp.float32),
    }
    for _ in range(cfg.num_layers):
        layer = {
            "wq": nrm(next(keys), (cfg.hidden, cfg.hidden)),
            "bq": jnp.zeros((cfg.hidden,), jnp.float32),
            "wk": nrm(next(keys), (cfg.hidden, cfg.hidden)),
            "bk": jnp.zeros((cfg.hidden,), jnp.float32),
            "wv": nrm(next(keys), (cfg.hidden, cfg.hidden)),
            "bv": jnp.zeros((cfg.hidden,), jnp.float32),
            "wo": nrm(next(keys), (cfg.hidden, cfg.hidden)),
            "bo": jnp.zeros((cfg.hidden,), jnp.float32),
            "ln1_g": jnp.ones((cfg.hidden,), jnp.float32),
            "ln1_b": jnp.zeros((cfg.hidden,), jnp.float32),
            "w1": nrm(next(keys), (cfg.hidden, cfg.intermediate)),
            "b1": jnp.zeros((cfg.intermediate,), jnp.float32),
            "w2": nrm(next(keys), (cfg.intermediate, cfg.hidden)),
            "b2": jnp.zeros((cfg.hidden,), jnp.float32),
            "ln2_g": jnp.ones((cfg.hidden,), jnp.float32),
            "ln2_b": jnp.zeros((cfg.hidden,), jnp.float32),
        }
        p["layers"].append(layer)
    return p


def pack_params(params, cfg):
    """Done ONCE outside jit: fuse QKV, stack layers as [L, ...], cast matmul
    weights to bf16 (MXU-native); biases / LN params stay f32."""
    L, H, I = cfg.num_layers, cfg.hidden, cfg.intermediate
    layers = params["layers"]

    def stack(name):
        return jnp.stack([lyr[name] for lyr in layers])

    wqkv = jnp.stack([jnp.concatenate([l["wq"], l["wk"], l["wv"]], axis=1)
                      for l in layers])                             # (L, H, 3H)
    bqkv = jnp.stack([jnp.concatenate([l["bq"], l["bk"], l["bv"]])
                      for l in layers]).reshape(L, 1, 3 * H)

    return {
        "word_emb": params["word_emb"],
        "pos_emb": params["pos_emb"],
        "type_emb": params["type_emb"],
        "emb_ln_g": params["emb_ln_g"].reshape(1, H),
        "emb_ln_b": params["emb_ln_b"].reshape(1, H),
        "wqkv": wqkv.astype(jnp.bfloat16),
        "bqkv": bqkv,
        "wo": stack("wo").astype(jnp.bfloat16),
        "bo": stack("bo").reshape(L, 1, H),
        "ln1_g": stack("ln1_g").reshape(L, 1, H),
        "ln1_b": stack("ln1_b").reshape(L, 1, H),
        "w1": stack("w1").astype(jnp.bfloat16),
        "b1": stack("b1").reshape(L, 1, I),
        "w2": stack("w2").astype(jnp.bfloat16),
        "b2": stack("b2").reshape(L, 1, H),
        "ln2_g": stack("ln2_g").reshape(L, 1, H),
        "ln2_b": stack("ln2_b").reshape(L, 1, H),
        "pooler_w": params["pooler_w"].astype(jnp.bfloat16),
        "pooler_b": params["pooler_b"].reshape(1, H),
    }


def plm_forward(packed, input_ids, attention_mask, token_type_ids, cfg):
    """Returns pooler_output: (batch, hidden)."""
    B, S = input_ids.shape
    H = cfg.hidden
    M = B * S

    # --- embeddings (table gathers = JAX/XLA glue) ---
    emb = (jnp.take(packed["word_emb"], input_ids, axis=0)
           + packed["pos_emb"][None, :S, :]
           + jnp.take(packed["type_emb"], token_type_ids, axis=0))
    x_emb = emb.reshape(M, H).astype(jnp.float32)

    # additive (M, M) mask: rows attend only within their own batch example
    # (block-diagonal) AND only to keys with attention_mask == 1.
    batch_ids = jnp.repeat(jnp.arange(B), S)
    same_batch = batch_ids[:, None] == batch_ids[None, :]
    key_valid = attention_mask.reshape(M) > 0
    mask_bd = jnp.where(same_batch & key_valid[None, :], 0.0, -1e9
                        ).astype(jnp.float32)

    return pallas_encoder(x_emb, mask_bd, packed, cfg=cfg, B=B, S=S)


# ----------------------------- pure-JAX reference ----------------------------

def plm_forward_ref(params, input_ids, attention_mask, token_type_ids, cfg):
    B, S = input_ids.shape
    H, NH, DH = cfg.hidden, cfg.num_heads, cfg.head_dim

    def ln(x, g, b):
        mu = jnp.mean(x, axis=-1, keepdims=True)
        var = jnp.mean(jnp.square(x - mu), axis=-1, keepdims=True)
        return (x - mu) * jax.lax.rsqrt(var + cfg.ln_eps) * g + b

    emb = (jnp.take(params["word_emb"], input_ids, axis=0)
           + params["pos_emb"][None, :S, :]
           + jnp.take(params["type_emb"], token_type_ids, axis=0))
    x = ln(emb.reshape(B * S, H), params["emb_ln_g"], params["emb_ln_b"])
    mask_add = ((1.0 - attention_mask.astype(jnp.float32)) * -1e9
                ).reshape(B, 1, 1, S)
    scale = 1.0 / (DH ** 0.5)

    for lyr in params["layers"]:
        q = (x @ lyr["wq"] + lyr["bq"]).reshape(B, S, NH, DH).transpose(0, 2, 1, 3)
        k = (x @ lyr["wk"] + lyr["bk"]).reshape(B, S, NH, DH).transpose(0, 2, 1, 3)
        v = (x @ lyr["wv"] + lyr["bv"]).reshape(B, S, NH, DH).transpose(0, 2, 1, 3)
        s = jnp.einsum("bhsd,bhtd->bhst", q, k) * scale + mask_add
        p = jax.nn.softmax(s, axis=-1)
        ctx = jnp.einsum("bhst,bhtd->bhsd", p, v).transpose(0, 2, 1, 3)
        ctx = ctx.reshape(B * S, H)
        x = ln(ctx @ lyr["wo"] + lyr["bo"] + x, lyr["ln1_g"], lyr["ln1_b"])
        ff = jax.nn.gelu(x @ lyr["w1"] + lyr["b1"], approximate=True)
        x = ln(ff @ lyr["w2"] + lyr["b2"] + x, lyr["ln2_g"], lyr["ln2_b"])

    cls = x.reshape(B, S, H)[:, 0, :]
    return jnp.tanh(cls @ params["pooler_w"] + params["pooler_b"])


# --------------------------------- driver ------------------------------------

if __name__ == "__main__":
    cfg = Config()
    B, S = 2, 8

    key = jax.random.PRNGKey(0)
    k_param, k_ids = jax.random.split(key)
    params = init_params(cfg, k_param)
    packed = pack_params(params, cfg)        # fused/stacked/bf16 weights, once

    # seq_tokens (as a BERT tokenizer would produce)
    input_ids = jax.random.randint(k_ids, (B, S), 0, cfg.vocab_size,
                                   dtype=jnp.int32)
    attention_mask = jnp.ones((B, S), dtype=jnp.int32)
    token_type_ids = jnp.zeros((B, S), dtype=jnp.int32)

    fwd = jax.jit(lambda pk, ids, am, tt: plm_forward(pk, ids, am, tt, cfg))
    pooled = fwd(packed, input_ids, attention_mask, token_type_ids)
    pooled = jax.block_until_ready(pooled)

    ref = plm_forward_ref(params, input_ids, attention_mask, token_type_ids, cfg)
    assert pooled.shape == (B, cfg.hidden)
    # tolerance loosened vs. pure-f32 reference: matmul inputs are bf16 and the
    # softmax denominator uses the approximate EUP reciprocal.
    assert jnp.allclose(pooled, ref, atol=2e-2, rtol=2e-2), "mismatch vs reference"

    print("KERNEL_OK")
</pallas_src>

<mosaic_0001>
module attributes {stable_mosaic.version = 11 : i64} {
  func.func @_encoder_kernel(%arg0: i32, %arg1: memref<16x128xf32, #tpu.memory_space<vmem>>, %arg2: memref<16x16xf32, #tpu.memory_space<vmem>>, %arg3: memref<1x128xf32, #tpu.memory_space<vmem>>, %arg4: memref<1x128xf32, #tpu.memory_space<vmem>>, %arg5: memref<1x128x384xbf16, #tpu.memory_space<vmem>>, %arg6: memref<1x1x384xf32, #tpu.memory_space<vmem>>, %arg7: memref<1x128x128xbf16, #tpu.memory_space<vmem>>, %arg8: memref<1x1x128xf32, #tpu.memory_space<vmem>>, %arg9: memref<1x1x128xf32, #tpu.memory_space<vmem>>, %arg10: memref<1x1x128xf32, #tpu.memory_space<vmem>>, %arg11: memref<1x128x256xbf16, #tpu.memory_space<vmem>>, %arg12: memref<1x1x256xf32, #tpu.memory_space<vmem>>, %arg13: memref<1x256x128xbf16, #tpu.memory_space<vmem>>, %arg14: memref<1x1x128xf32, #tpu.memory_space<vmem>>, %arg15: memref<1x1x128xf32, #tpu.memory_space<vmem>>, %arg16: memref<1x1x128xf32, #tpu.memory_space<vmem>>, %arg17: memref<128x128xbf16, #tpu.memory_space<vmem>>, %arg18: memref<1x128xf32, #tpu.memory_space<vmem>>, %arg19: memref<2x128xf32, #tpu.memory_space<vmem>>, %arg20: memref<16x128xf32, #tpu.memory_space<vmem>>, %arg21: memref<16x128xf32, #tpu.memory_space<vmem>>) attributes {dimension_semantics = [#tpu.dimension_semantics<arbitrary>], iteration_bounds = array<i64: 2>, scalar_prefetch = 0 : i64, scratch_operands = 2 : i64, tpu.core_type = #tpu.core_type<tc>, window_params = [{pipeline_mode = #tpu.pipeline_mode<synchronous>, transform_indices = @transform_0, window_bounds = array<i64: 16, 128>}, {pipeline_mode = #tpu.pipeline_mode<synchronous>, transform_indices = @transform_1, window_bounds = array<i64: 16, 16>}, {pipeline_mode = #tpu.pipeline_mode<synchronous>, transform_indices = @transform_2, window_bounds = array<i64: 1, 128>}, {pipeline_mode = #tpu.pipeline_mode<synchronous>, transform_indices = @transform_3, window_bounds = array<i64: 1, 128>}, {transform_indices = @transform_4, window_bounds = array<i64: 1, 128, 384>}, {transform_indices = @transform_5, window_bounds = array<i64: 1, 1, 384>}, {transform_indices = @transform_6, window_bounds = array<i64: 1, 128, 128>}, {transform_indices = @transform_7, window_bounds = array<i64: 1, 1, 128>}, {transform_indices = @transform_8, window_bounds = array<i64: 1, 1, 128>}, {transform_indices = @transform_9, window_bounds = array<i64: 1, 1, 128>}, {transform_indices = @transform_10, window_bounds = array<i64: 1, 128, 256>}, {transform_indices = @transform_11, window_bounds = array<i64: 1, 1, 256>}, {transform_indices = @transform_12, window_bounds = array<i64: 1, 256, 128>}, {transform_indices = @transform_13, window_bounds = array<i64: 1, 1, 128>}, {transform_indices = @transform_14, window_bounds = array<i64: 1, 1, 128>}, {transform_indices = @transform_15, window_bounds = array<i64: 1, 1, 128>}, {pipeline_mode = #tpu.pipeline_mode<synchronous>, transform_indices = @transform_16, window_bounds = array<i64: 128, 128>}, {pipeline_mode = #tpu.pipeline_mode<synchronous>, transform_indices = @transform_17, window_bounds = array<i64: 1, 128>}, {pipeline_mode = #tpu.pipeline_mode<synchronous>, transform_indices = @transform_18, window_bounds = array<i64: 2, 128>}]} {
    %c0_i32 = arith.constant 0 : i32
    %0 = arith.cmpi eq, %arg0, %c0_i32 : i32
    %1 = arith.extui %0 : i1 to i32
    %c0_i32_0 = arith.constant 0 : i32
    %2 = arith.cmpi ne, %1, %c0_i32_0 : i32
    scf.if %2 {
      %c0_75 = arith.constant 0 : index
      %c0_76 = arith.constant 0 : index
      %155 = vector.load %arg1[%c0_75, %c0_76] : memref<16x128xf32, #tpu.memory_space<vmem>>, vector<16x128xf32>
      %c0_77 = arith.constant 0 : index
      %c0_78 = arith.constant 0 : index
      %156 = vector.load %arg3[%c0_77, %c0_78] : memref<1x128xf32, #tpu.memory_space<vmem>>, vector<1x128xf32>
      %c0_79 = arith.constant 0 : index
      %c0_80 = arith.constant 0 : index
      %157 = vector.load %arg4[%c0_79, %c0_80] : memref<1x128xf32, #tpu.memory_space<vmem>>, vector<1x128xf32>
      %cst_81 = arith.constant dense<0.000000e+00> : vector<16xf32>
      %158 = vector.multi_reduction <add>, %155, %cst_81 [1] : vector<16x128xf32> to vector<16xf32>
      %159 = vector.shape_cast %158 : vector<16xf32> to vector<16x1xf32>
      %cst_82 = arith.constant 1.280000e+02 : f32
      %160 = vector.broadcast %cst_82 : f32 to vector<16x1xf32>
      %161 = arith.divf %159, %160 : vector<16x1xf32>
      %162 = vector.broadcast %161 : vector<16x1xf32> to vector<16x128xf32>
      %163 = arith.subf %155, %162 : vector<16x128xf32>
      %164 = arith.mulf %163, %163 : vector<16x128xf32>
      %cst_83 = arith.constant dense<0.000000e+00> : vector<16xf32>
      %165 = vector.multi_reduction <add>, %164, %cst_83 [1] : vector<16x128xf32> to vector<16xf32>
      %166 = vector.shape_cast %165 : vector<16xf32> to vector<16x1xf32>
      %cst_84 = arith.constant 1.280000e+02 : f32
      %167 = vector.broadcast %cst_84 : f32 to vector<16x1xf32>
      %168 = arith.divf %166, %167 : vector<16x1xf32>
      %169 = vector.broadcast %161 : vector<16x1xf32> to vector<16x128xf32>
      %170 = arith.subf %155, %169 : vector<16x128xf32>
      %cst_85 = arith.constant 9.99999996E-13 : f32
      %171 = vector.broadcast %cst_85 : f32 to vector<16x1xf32>
      %172 = arith.addf %168, %171 : vector<16x1xf32>
      %173 = math.rsqrt %172 : vector<16x1xf32>
      %174 = vector.broadcast %173 : vector<16x1xf32> to vector<16x128xf32>
      %175 = arith.mulf %170, %174 : vector<16x128xf32>
      %176 = vector.broadcast %156 : vector<1x128xf32> to vector<16x128xf32>
      %177 = arith.mulf %175, %176 : vector<16x128xf32>
      %178 = vector.broadcast %157 : vector<1x128xf32> to vector<16x128xf32>
      %179 = arith.addf %177, %178 : vector<16x128xf32>
      %c0_86 = arith.constant 0 : index
      %c0_87 = arith.constant 0 : index
      %180 = vector.load %arg20[%c0_86, %c0_87] : memref<16x128xf32, #tpu.memory_space<vmem>>, vector<16x128xf32>
      tpu.vector_store %arg20[%c0_86, %c0_87], %179 {strides = array<i32>} : memref<16x128xf32, #tpu.memory_space<vmem>>, vector<16x128xf32>,
    } else {
    }
    %c0 = arith.constant 0 : index
    %c0_1 = arith.constant 0 : index
    %3 = vector.load %arg20[%c0, %c0_1] : memref<16x128xf32, #tpu.memory_space<vmem>>, vector<16x128xf32>
    %4 = arith.truncf %3 : vector<16x128xf32> to vector<16x128xbf16>
    %c0_2 = arith.constant 0 : index
    %c0_3 = arith.constant 0 : index
    %c0_4 = arith.constant 0 : index
    %5 = vector.load %arg5[%c0_2, %c0_3, %c0_4] : memref<1x128x384xbf16, #tpu.memory_space<vmem>>, vector<1x128x384xbf16>
    %6 = vector.shape_cast %5 : vector<1x128x384xbf16> to vector<128x384xbf16>
    %cst = arith.constant dense<0.000000e+00> : vector<16x384xf32>
    %7 = tpu.matmul %4, %6, %cst {dimension_numbers = #tpu.dot_dimension_numbers<[1], [0], [0], [1], [0, 0, 1, 1], [], []>} : vector<16x128xbf16>, vector<128x384xbf16>, vector<16x384xf32> -> vector<16x384xf32>
    %c0_5 = arith.constant 0 : index
    %c0_6 = arith.constant 0 : index
    %c0_7 = arith.constant 0 : index
    %8 = vector.load %arg6[%c0_5, %c0_6, %c0_7] : memref<1x1x384xf32, #tpu.memory_space<vmem>>, vector<1x1x384xf32>
    %9 = vector.shape_cast %8 : vector<1x1x384xf32> to vector<1x384xf32>
    %10 = vector.broadcast %9 : vector<1x384xf32> to vector<16x384xf32>
    %11 = arith.addf %7, %10 : vector<16x384xf32>
    %c0_8 = arith.constant 0 : index
    %c0_9 = arith.constant 0 : index
    %12 = vector.load %arg2[%c0_8, %c0_9] : memref<16x16xf32, #tpu.memory_space<vmem>>, vector<16x16xf32>
    %13 = vector.extract_strided_slice %11 {offsets = [0, 0], sizes = [16, 64], strides = [1, 1]} : vector<16x384xf32> to vector<16x64xf32>
    %14 = arith.truncf %13 : vector<16x64xf32> to vector<16x64xbf16>
    %15 = vector.extract_strided_slice %11 {offsets = [0, 128], sizes = [16, 64], strides = [1, 1]} : vector<16x384xf32> to vector<16x64xf32>
    %16 = arith.truncf %15 : vector<16x64xf32> to vector<16x64xbf16>
    %17 = vector.extract_strided_slice %11 {offsets = [0, 256], sizes = [16, 64], strides = [1, 1]} : vector<16x384xf32> to vector<16x64xf32>
    %18 = arith.truncf %17 : vector<16x64xf32> to vector<16x64xbf16>
    %cst_10 = arith.constant dense<0.000000e+00> : vector<16x16xf32>
    %19 = tpu.matmul %14, %16, %cst_10 {dimension_numbers = #tpu.dot_dimension_numbers<[1], [1], [0], [0], [0, 0, 1, 0], [], []>} : vector<16x64xbf16>, vector<16x64xbf16>, vector<16x16xf32> -> vector<16x16xf32>
    %cst_11 = arith.constant 1.250000e-01 : f32
    %20 = vector.broadcast %cst_11 : f32 to vector<16x16xf32>
    %21 = arith.mulf %19, %20 : vector<16x16xf32>
    %22 = arith.addf %21, %12 : vector<16x16xf32>
    %cst_12 = arith.constant dense<0xFF800000> : vector<16xf32>
    %23 = vector.multi_reduction <maximumf>, %22, %cst_12 [1] : vector<16x16xf32> to vector<16xf32>
    %24 = vector.shape_cast %23 : vector<16xf32> to vector<16x1xf32>
    %25 = vector.broadcast %24 : vector<16x1xf32> to vector<16x16xf32>
    %26 = arith.subf %22, %25 : vector<16x16xf32>
    %27 = math.exp %26 : vector<16x16xf32>
    %cst_13 = arith.constant dense<0.000000e+00> : vector<16xf32>
    %28 = vector.multi_reduction <add>, %27, %cst_13 [1] : vector<16x16xf32> to vector<16xf32>
    %29 = vector.shape_cast %28 : vector<16xf32> to vector<16x1xf32>
    %30 = tpu.reciprocal %29 {approx = true} : vector<16x1xf32> -> vector<16x1xf32>
    %31 = vector.broadcast %30 : vector<16x1xf32> to vector<16x16xf32>
    %32 = arith.mulf %27, %31 : vector<16x16xf32>
    %33 = arith.truncf %32 : vector<16x16xf32> to vector<16x16xbf16>
    %cst_14 = arith.constant dense<0.000000e+00> : vector<16x64xf32>
    %34 = tpu.matmul %33, %18, %cst_14 {dimension_numbers = #tpu.dot_dimension_numbers<[1], [0], [0], [1], [0, 0, 1, 1], [], []>} : vector<16x16xbf16>, vector<16x64xbf16>, vector<16x64xf32> -> vector<16x64xf32>
    %c0_15 = arith.constant 0 : index
    %c0_16 = arith.constant 0 : index
    %35 = vector.load %arg21[%c0_15, %c0_16] : memref<16x128xf32, #tpu.memory_space<vmem>>, vector<16x64xf32>
    tpu.vector_store %arg21[%c0_15, %c0_16], %34 {strides = array<i32>} : memref<16x128xf32, #tpu.memory_space<vmem>>, vector<16x64xf32>,
    %36 = vector.extract_strided_slice %11 {offsets = [0, 64], sizes = [16, 64], strides = [1, 1]} : vector<16x384xf32> to vector<16x64xf32>
    %37 = arith.truncf %36 : vector<16x64xf32> to vector<16x64xbf16>
    %38 = vector.extract_strided_slice %11 {offsets = [0, 192], sizes = [16, 64], strides = [1, 1]} : vector<16x384xf32> to vector<16x64xf32>
    %39 = arith.truncf %38 : vector<16x64xf32> to vector<16x64xbf16>
    %40 = vector.extract_strided_slice %11 {offsets = [0, 320], sizes = [16, 64], strides = [1, 1]} : vector<16x384xf32> to vector<16x64xf32>
    %41 = arith.truncf %40 : vector<16x64xf32> to vector<16x64xbf16>
    %cst_17 = arith.constant dense<0.000000e+00> : vector<16x16xf32>
    %42 = tpu.matmul %37, %39, %cst_17 {dimension_numbers = #tpu.dot_dimension_numbers<[1], [1], [0], [0], [0, 0, 1, 0], [], []>} : vector<16x64xbf16>, vector<16x64xbf16>, vector<16x16xf32> -> vector<16x16xf32>
    %cst_18 = arith.constant 1.250000e-01 : f32
    %43 = vector.broadcast %cst_18 : f32 to vector<16x16xf32>
    %44 = arith.mulf %42, %43 : vector<16x16xf32>
    %45 = arith.addf %44, %12 : vector<16x16xf32>
    %cst_19 = arith.constant dense<0xFF800000> : vector<16xf32>
    %46 = vector.multi_reduction <maximumf>, %45, %cst_19 [1] : vector<16x16xf32> to vector<16xf32>
    %47 = vector.shape_cast %46 : vector<16xf32> to vector<16x1xf32>
    %48 = vector.broadcast %47 : vector<16x1xf32> to vector<16x16xf32>
    %49 = arith.subf %45, %48 : vector<16x16xf32>
    %50 = math.exp %49 : vector<16x16xf32>
    %cst_20 = arith.constant dense<0.000000e+00> : vector<16xf32>
    %51 = vector.multi_reduction <add>, %50, %cst_20 [1] : vector<16x16xf32> to vector<16xf32>
    %52 = vector.shape_cast %51 : vector<16xf32> to vector<16x1xf32>
    %53 = tpu.reciprocal %52 {approx = true} : vector<16x1xf32> -> vector<16x1xf32>
    %54 = vector.broadcast %53 : vector<16x1xf32> to vector<16x16xf32>
    %55 = arith.mulf %50, %54 : vector<16x16xf32>
    %56 = arith.truncf %55 : vector<16x16xf32> to vector<16x16xbf16>
    %cst_21 = arith.constant dense<0.000000e+00> : vector<16x64xf32>
    %57 = tpu.matmul %56, %41, %cst_21 {dimension_numbers = #tpu.dot_dimension_numbers<[1], [0], [0], [1], [0, 0, 1, 1], [], []>} : vector<16x16xbf16>, vector<16x64xbf16>, vector<16x64xf32> -> vector<16x64xf32>
    %c0_22 = arith.constant 0 : index
    %c64 = arith.constant 64 : index
    %58 = vector.load %arg21[%c0_22, %c64] : memref<16x128xf32, #tpu.memory_space<vmem>>, vector<16x64xf32>
    tpu.vector_store %arg21[%c0_22, %c64], %57 {strides = array<i32>} : memref<16x128xf32, #tpu.memory_space<vmem>>, vector<16x64xf32>,
    %c0_23 = arith.constant 0 : index
    %c0_24 = arith.constant 0 : index
    %59 = vector.load %arg21[%c0_23, %c0_24] : memref<16x128xf32, #tpu.memory_space<vmem>>, vector<16x128xf32>
    %60 = arith.truncf %59 : vector<16x128xf32> to vector<16x128xbf16>
    %c0_25 = arith.constant 0 : index
    %c0_26 = arith.constant 0 : index
    %c0_27 = arith.constant 0 : index
    %61 = vector.load %arg7[%c0_25, %c0_26, %c0_27] : memref<1x128x128xbf16, #tpu.memory_space<vmem>>, vector<1x128x128xbf16>
    %62 = vector.shape_cast %61 : vector<1x128x128xbf16> to vector<128x128xbf16>
    %cst_28 = arith.constant dense<0.000000e+00> : vector<16x128xf32>
    %63 = tpu.matmul %60, %62, %cst_28 {dimension_numbers = #tpu.dot_dimension_numbers<[1], [0], [0], [1], [0, 0, 1, 1], [], []>} : vector<16x128xbf16>, vector<128x128xbf16>, vector<16x128xf32> -> vector<16x128xf32>
    %c0_29 = arith.constant 0 : index
    %c0_30 = arith.constant 0 : index
    %c0_31 = arith.constant 0 : index
    %64 = vector.load %arg8[%c0_29, %c0_30, %c0_31] : memref<1x1x128xf32, #tpu.memory_space<vmem>>, vector<1x1x128xf32>
    %65 = vector.shape_cast %64 : vector<1x1x128xf32> to vector<1x128xf32>
    %66 = vector.broadcast %65 : vector<1x128xf32> to vector<16x128xf32>
    %67 = arith.addf %63, %66 : vector<16x128xf32>
    %68 = arith.addf %67, %3 : vector<16x128xf32>
    %c0_32 = arith.constant 0 : index
    %c0_33 = arith.constant 0 : index
    %c0_34 = arith.constant 0 : index
    %69 = vector.load %arg9[%c0_32, %c0_33, %c0_34] : memref<1x1x128xf32, #tpu.memory_space<vmem>>, vector<1x1x128xf32>
    %70 = vector.shape_cast %69 : vector<1x1x128xf32> to vector<1x128xf32>
    %c0_35 = arith.constant 0 : index
    %c0_36 = arith.constant 0 : index
    %c0_37 = arith.constant 0 : index
    %71 = vector.load %arg10[%c0_35, %c0_36, %c0_37] : memref<1x1x128xf32, #tpu.memory_space<vmem>>, vector<1x1x128xf32>
    %72 = vector.shape_cast %71 : vector<1x1x128xf32> to vector<1x128xf32>
    %cst_38 = arith.constant dense<0.000000e+00> : vector<16xf32>
    %73 = vector.multi_reduction <add>, %68, %cst_38 [1] : vector<16x128xf32> to vector<16xf32>
    %74 = vector.shape_cast %73 : vector<16xf32> to vector<16x1xf32>
    %cst_39 = arith.constant 1.280000e+02 : f32
    %75 = vector.broadcast %cst_39 : f32 to vector<16x1xf32>
    %76 = arith.divf %74, %75 : vector<16x1xf32>
    %77 = vector.broadcast %76 : vector<16x1xf32> to vector<16x128xf32>
    %78 = arith.subf %68, %77 : vector<16x128xf32>
    %79 = arith.mulf %78, %78 : vector<16x128xf32>
    %cst_40 = arith.constant dense<0.000000e+00> : vector<16xf32>
    %80 = vector.multi_reduction <add>, %79, %cst_40 [1] : vector<16x128xf32> to vector<16xf32>
    %81 = vector.shape_cast %80 : vector<16xf32> to vector<16x1xf32>
    %cst_41 = arith.constant 1.280000e+02 : f32
    %82 = vector.broadcast %cst_41 : f32 to vector<16x1xf32>
    %83 = arith.divf %81, %82 : vector<16x1xf32>
    %84 = vector.broadcast %76 : vector<16x1xf32> to vector<16x128xf32>
    %85 = arith.subf %68, %84 : vector<16x128xf32>
    %cst_42 = arith.constant 9.99999996E-13 : f32
    %86 = vector.broadcast %cst_42 : f32 to vector<16x1xf32>
    %87 = arith.addf %83, %86 : vector<16x1xf32>
    %88 = math.rsqrt %87 : vector<16x1xf32>
    %89 = vector.broadcast %88 : vector<16x1xf32> to vector<16x128xf32>
    %90 = arith.mulf %85, %89 : vector<16x128xf32>
    %91 = vector.broadcast %70 : vector<1x128xf32> to vector<16x128xf32>
    %92 = arith.mulf %90, %91 : vector<16x128xf32>
    %93 = vector.broadcast %72 : vector<1x128xf32> to vector<16x128xf32>
    %94 = arith.addf %92, %93 : vector<16x128xf32>
    %95 = arith.truncf %94 : vector<16x128xf32> to vector<16x128xbf16>
    %c0_43 = arith.constant 0 : index
    %c0_44 = arith.constant 0 : index
    %c0_45 = arith.constant 0 : index
    %96 = vector.load %arg11[%c0_43, %c0_44, %c0_45] : memref<1x128x256xbf16, #tpu.memory_space<vmem>>, vector<1x128x256xbf16>
    %97 = vector.shape_cast %96 : vector<1x128x256xbf16> to vector<128x256xbf16>
    %cst_46 = arith.constant dense<0.000000e+00> : vector<16x256xf32>
    %98 = tpu.matmul %95, %97, %cst_46 {dimension_numbers = #tpu.dot_dimension_numbers<[1], [0], [0], [1], [0, 0, 1, 1], [], []>} : vector<16x128xbf16>, vector<128x256xbf16>, vector<16x256xf32> -> vector<16x256xf32>
    %c0_47 = arith.constant 0 : index
    %c0_48 = arith.constant 0 : index
    %c0_49 = arith.constant 0 : index
    %99 = vector.load %arg12[%c0_47, %c0_48, %c0_49] : memref<1x1x256xf32, #tpu.memory_space<vmem>>, vector<1x1x256xf32>
    %100 = vector.shape_cast %99 : vector<1x1x256xf32> to vector<1x256xf32>
    %101 = vector.broadcast %100 : vector<1x256xf32> to vector<16x256xf32>
    %102 = arith.addf %98, %101 : vector<16x256xf32>
    %103 = arith.mulf %102, %102 : vector<16x256xf32>
    %104 = arith.mulf %102, %103 : vector<16x256xf32>
    %cst_50 = arith.constant 4.471500e-02 : f32
    %105 = vector.broadcast %cst_50 : f32 to vector<16x256xf32>
    %106 = arith.mulf %105, %104 : vector<16x256xf32>
    %107 = arith.addf %102, %106 : vector<16x256xf32>
    %cst_51 = arith.constant 0.797884583 : f32
    %108 = vector.broadcast %cst_51 : f32 to vector<16x256xf32>
    %109 = arith.mulf %108, %107 : vector<16x256xf32>
    %110 = math.tanh %109 : vector<16x256xf32>
    %cst_52 = arith.constant 1.000000e+00 : f32
    %111 = vector.broadcast %cst_52 : f32 to vector<16x256xf32>
    %112 = arith.addf %111, %110 : vector<16x256xf32>
    %cst_53 = arith.constant 5.000000e-01 : f32
    %113 = vector.broadcast %cst_53 : f32 to vector<16x256xf32>
    %114 = arith.mulf %113, %112 : vector<16x256xf32>
    %115 = arith.mulf %102, %114 : vector<16x256xf32>
    %116 = arith.truncf %115 : vector<16x256xf32> to vector<16x256xbf16>
    %c0_54 = arith.constant 0 : index
    %c0_55 = arith.constant 0 : index
    %c0_56 = arith.constant 0 : index
    %117 = vector.load %arg13[%c0_54, %c0_55, %c0_56] : memref<1x256x128xbf16, #tpu.memory_space<vmem>>, vector<1x256x128xbf16>
    %118 = vector.shape_cast %117 : vector<1x256x128xbf16> to vector<256x128xbf16>
    %cst_57 = arith.constant dense<0.000000e+00> : vector<16x128xf32>
    %119 = tpu.matmul %116, %118, %cst_57 {dimension_numbers = #tpu.dot_dimension_numbers<[1], [0], [0], [1], [0, 0, 1, 1], [], []>} : vector<16x256xbf16>, vector<256x128xbf16>, vector<16x128xf32> -> vector<16x128xf32>
    %c0_58 = arith.constant 0 : index
    %c0_59 = arith.constant 0 : index
    %c0_60 = arith.constant 0 : index
    %120 = vector.load %arg14[%c0_58, %c0_59, %c0_60] : memref<1x1x128xf32, #tpu.memory_space<vmem>>, vector<1x1x128xf32>
    %121 = vector.shape_cast %120 : vector<1x1x128xf32> to vector<1x128xf32>
    %122 = vector.broadcast %121 : vector<1x128xf32> to vector<16x128xf32>
    %123 = arith.addf %119, %122 : vector<16x128xf32>
    %124 = arith.addf %123, %94 : vector<16x128xf32>
    %c0_61 = arith.constant 0 : index
    %c0_62 = arith.constant 0 : index
    %c0_63 = arith.constant 0 : index
    %125 = vector.load %arg15[%c0_61, %c0_62, %c0_63] : memref<1x1x128xf32, #tpu.memory_space<vmem>>, vector<1x1x128xf32>
    %126 = vector.shape_cast %125 : vector<1x1x128xf32> to vector<1x128xf32>
    %c0_64 = arith.constant 0 : index
    %c0_65 = arith.constant 0 : index
    %c0_66 = arith.constant 0 : index
    %127 = vector.load %arg16[%c0_64, %c0_65, %c0_66] : memref<1x1x128xf32, #tpu.memory_space<vmem>>, vector<1x1x128xf32>
    %128 = vector.shape_cast %127 : vector<1x1x128xf32> to vector<1x128xf32>
    %cst_67 = arith.constant dense<0.000000e+00> : vector<16xf32>
    %129 = vector.multi_reduction <add>, %124, %cst_67 [1] : vector<16x128xf32> to vector<16xf32>
    %130 = vector.shape_cast %129 : vector<16xf32> to vector<16x1xf32>
    %cst_68 = arith.constant 1.280000e+02 : f32
    %131 = vector.broadcast %cst_68 : f32 to vector<16x1xf32>
    %132 = arith.divf %130, %131 : vector<16x1xf32>
    %133 = vector.broadcast %132 : vector<16x1xf32> to vector<16x128xf32>
    %134 = arith.subf %124, %133 : vector<16x128xf32>
    %135 = arith.mulf %134, %134 : vector<16x128xf32>
    %cst_69 = arith.constant dense<0.000000e+00> : vector<16xf32>
    %136 = vector.multi_reduction <add>, %135, %cst_69 [1] : vector<16x128xf32> to vector<16xf32>
    %137 = vector.shape_cast %136 : vector<16xf32> to vector<16x1xf32>
    %cst_70 = arith.constant 1.280000e+02 : f32
    %138 = vector.broadcast %cst_70 : f32 to vector<16x1xf32>
    %139 = arith.divf %137, %138 : vector<16x1xf32>
    %140 = vector.broadcast %132 : vector<16x1xf32> to vector<16x128xf32>
    %141 = arith.subf %124, %140 : vector<16x128xf32>
    %cst_71 = arith.constant 9.99999996E-13 : f32
    %142 = vector.broadcast %cst_71 : f32 to vector<16x1xf32>
    %143 = arith.addf %139, %142 : vector<16x1xf32>
    %144 = math.rsqrt %143 : vector<16x1xf32>
    %145 = vector.broadcast %144 : vector<16x1xf32> to vector<16x128xf32>
    %146 = arith.mulf %141, %145 : vector<16x128xf32>
    %147 = vector.broadcast %126 : vector<1x128xf32> to vector<16x128xf32>
    %148 = arith.mulf %146, %147 : vector<16x128xf32>
    %149 = vector.broadcast %128 : vector<1x128xf32> to vector<16x128xf32>
    %150 = arith.addf %148, %149 : vector<16x128xf32>
    %c0_72 = arith.constant 0 : index
    %c0_73 = arith.constant 0 : index
    %151 = vector.load %arg20[%c0_72, %c0_73] : memref<16x128xf32, #tpu.memory_space<vmem>>, vector<16x128xf32>
    tpu.vector_store %arg20[%c0_72, %c0_73], %150 {strides = array<i32>} : memref<16x128xf32, #tpu.memory_space<vmem>>, vector<16x128xf32>,
    %c1_i32 = arith.constant 1 : i32
    %152 = arith.cmpi eq, %arg0, %c1_i32 : i32
    %153 = arith.extui %152 : i1 to i32
    %c0_i32_74 = arith.constant 0 : i32
    %154 = arith.cmpi ne, %153, %c0_i32_74 : i32
    scf.if %154 {
      %155 = vector.extract_strided_slice %150 {offsets = [0, 0], sizes = [1, 128], strides = [1, 1]} : vector<16x128xf32> to vector<1x128xf32>
      %156 = vector.extract_strided_slice %150 {offsets = [8, 0], sizes = [1, 128], strides = [1, 1]} : vector<16x128xf32> to vector<1x128xf32>
      %157 = tpu.concatenate %155, %156 in 0 : vector<1x128xf32>, vector<1x128xf32> -> vector<2x128xf32>
      %158 = arith.truncf %157 : vector<2x128xf32> to vector<2x128xbf16>
      %c0_75 = arith.constant 0 : index
      %c0_76 = arith.constant 0 : index
      %159 = vector.load %arg17[%c0_75, %c0_76] : memref<128x128xbf16, #tpu.memory_space<vmem>>, vector<128x128xbf16>
      %cst_77 = arith.constant dense<0.000000e+00> : vector<2x128xf32>
      %160 = tpu.matmul %158, %159, %cst_77 {dimension_numbers = #tpu.dot_dimension_numbers<[1], [0], [0], [1], [0, 0, 1, 1], [], []>} : vector<2x128xbf16>, vector<128x128xbf16>, vector<2x128xf32> -> vector<2x128xf32>
      %c0_78 = arith.constant 0 : index
      %c0_79 = arith.constant 0 : index
      %161 = vector.load %arg18[%c0_78, %c0_79] : memref<1x128xf32, #tpu.memory_space<vmem>>, vector<1x128xf32>
      %162 = vector.broadcast %161 : vector<1x128xf32> to vector<2x128xf32>
      %163 = arith.addf %160, %162 : vector<2x128xf32>
      %164 = math.tanh %163 : vector<2x128xf32>
      %c0_80 = arith.constant 0 : index
      %c0_81 = arith.constant 0 : index
      %165 = vector.load %arg19[%c0_80, %c0_81] : memref<2x128xf32, #tpu.memory_space<vmem>>, vector<2x128xf32>
      tpu.vector_store %arg19[%c0_80, %c0_81], %164 {strides = array<i32>} : memref<2x128xf32, #tpu.memory_space<vmem>>, vector<2x128xf32>,
    } else {
    }
    return
  }
  func.func @transform_0(%arg0: i32) -> (i32, i32) {
    %c0_i32 = arith.constant 0 : i32
    %c0_i32_0 = arith.constant 0 : i32
    %c0_i32_1 = arith.constant 0 : i32
    return %c0_i32, %c0_i32_0 : i32, i32
  }
  func.func @transform_1(%arg0: i32) -> (i32, i32) {
    %c0_i32 = arith.constant 0 : i32
    %c0_i32_0 = arith.constant 0 : i32
    %c0_i32_1 = arith.constant 0 : i32
    return %c0_i32, %c0_i32_0 : i32, i32
  }
  func.func @transform_2(%arg0: i32) -> (i32, i32) {
    %c0_i32 = arith.constant 0 : i32
    %c0_i32_0 = arith.constant 0 : i32
    %c0_i32_1 = arith.constant 0 : i32
    return %c0_i32, %c0_i32_0 : i32, i32
  }
  func.func @transform_3(%arg0: i32) -> (i32, i32) {
    %c0_i32 = arith.constant 0 : i32
    %c0_i32_0 = arith.constant 0 : i32
    %c0_i32_1 = arith.constant 0 : i32
    return %c0_i32, %c0_i32_0 : i32, i32
  }
  func.func @transform_4(%arg0: i32) -> (i32, i32, i32) {
    %c0_i32 = arith.constant 0 : i32
    %c0_i32_0 = arith.constant 0 : i32
    %c0_i32_1 = arith.constant 0 : i32
    return %arg0, %c0_i32, %c0_i32_0 : i32, i32, i32
  }
  func.func @transform_5(%arg0: i32) -> (i32, i32, i32) {
    %c0_i32 = arith.constant 0 : i32
    %c0_i32_0 = arith.constant 0 : i32
    %c0_i32_1 = arith.constant 0 : i32
    return %arg0, %c0_i32, %c0_i32_0 : i32, i32, i32
  }
  func.func @transform_6(%arg0: i32) -> (i32, i32, i32) {
    %c0_i32 = arith.constant 0 : i32
    %c0_i32_0 = arith.constant 0 : i32
    %c0_i32_1 = arith.constant 0 : i32
    return %arg0, %c0_i32, %c0_i32_0 : i32, i32, i32
  }
  func.func @transform_7(%arg0: i32) -> (i32, i32, i32) {
    %c0_i32 = arith.constant 0 : i32
    %c0_i32_0 = arith.constant 0 : i32
    %c0_i32_1 = arith.constant 0 : i32
    return %arg0, %c0_i32, %c0_i32_0 : i32, i32, i32
  }
  func.func @transform_8(%arg0: i32) -> (i32, i32, i32) {
    %c0_i32 = arith.constant 0 : i32
    %c0_i32_0 = arith.constant 0 : i32
    %c0_i32_1 = arith.constant 0 : i32
    return %arg0, %c0_i32, %c0_i32_0 : i32, i32, i32
  }
  func.func @transform_9(%arg0: i32) -> (i32, i32, i32) {
    %c0_i32 = arith.constant 0 : i32
    %c0_i32_0 = arith.constant 0 : i32
    %c0_i32_1 = arith.constant 0 : i32
    return %arg0, %c0_i32, %c0_i32_0 : i32, i32, i32
  }
  func.func @transform_10(%arg0: i32) -> (i32, i32, i32) {
    %c0_i32 = arith.constant 0 : i32
    %c0_i32_0 = arith.constant 0 : i32
    %c0_i32_1 = arith.constant 0 : i32
    return %arg0, %c0_i32, %c0_i32_0 : i32, i32, i32
  }
  func.func @transform_11(%arg0: i32) -> (i32, i32, i32) {
    %c0_i32 = arith.constant 0 : i32
    %c0_i32_0 = arith.constant 0 : i32
    %c0_i32_1 = arith.constant 0 : i32
    return %arg0, %c0_i32, %c0_i32_0 : i32, i32, i32
  }
  func.func @transform_12(%arg0: i32) -> (i32, i32, i32) {
    %c0_i32 = arith.constant 0 : i32
    %c0_i32_0 = arith.constant 0 : i32
    %c0_i32_1 = arith.constant 0 : i32
    return %arg0, %c0_i32, %c0_i32_0 : i32, i32, i32
  }
  func.func @transform_13(%arg0: i32) -> (i32, i32, i32) {
    %c0_i32 = arith.constant 0 : i32
    %c0_i32_0 = arith.constant 0 : i32
    %c0_i32_1 = arith.constant 0 : i32
    return %arg0, %c0_i32, %c0_i32_0 : i32, i32, i32
  }
  func.func @transform_14(%arg0: i32) -> (i32, i32, i32) {
    %c0_i32 = arith.constant 0 : i32
    %c0_i32_0 = arith.constant 0 : i32
    %c0_i32_1 = arith.constant 0 : i32
    return %arg0, %c0_i32, %c0_i32_0 : i32, i32, i32
  }
  func.func @transform_15(%arg0: i32) -> (i32, i32, i32) {
    %c0_i32 = arith.constant 0 : i32
    %c0_i32_0 = arith.constant 0 : i32
    %c0_i32_1 = arith.constant 0 : i32
    return %arg0, %c0_i32, %c0_i32_0 : i32, i32, i32
  }
  func.func @transform_16(%arg0: i32) -> (i32, i32) {
    %c0_i32 = arith.constant 0 : i32
    %c0_i32_0 = arith.constant 0 : i32
    %c0_i32_1 = arith.constant 0 : i32
    return %c0_i32, %c0_i32_0 : i32, i32
  }
  func.func @transform_17(%arg0: i32) -> (i32, i32) {
    %c0_i32 = arith.constant 0 : i32
    %c0_i32_0 = arith.constant 0 : i32
    %c0_i32_1 = arith.constant 0 : i32
    return %c0_i32, %c0_i32_0 : i32, i32
  }
  func.func @transform_18(%arg0: i32) -> (i32, i32) {
    %c0_i32 = arith.constant 0 : i32
    %c0_i32_0 = arith.constant 0 : i32
    %c0_i32_1 = arith.constant 0 : i32
    return %c0_i32, %c0_i32_0 : i32, i32
  }
}

</mosaic_0001>

<llo_original>
// kernel: _lambda_.1
$region0: #{_lambda_.1}
  #allocation0 [shape = 'u32[]', space=smem, size = 0x4, offset = 0x4, fixed_abs, tag = 'smem constant byte address 0x4 - core index']
  #allocation1 [shape = 'u32[144,128]{1,0:T(1,128)}', space=vmem, size = 0x12000, scoped, tag = 'internal scratch']
  #allocation2 [shape = 'f32[16,128]{1,0:T(8,128)}', space=vmem, size = 0x2000, scoped, tag = 'scratch operand']
  #allocation3 [shape = 'f32[16,128]{1,0:T(8,128)}', space=vmem, size = 0x2000, scoped, tag = 'scratch operand']
  %s0 = inlined_call_operand.vmem [shape: f32[16,128], index: 0, kind: input, shape index: {}]
  %s1 = inlined_call_operand.vmem [shape: f32[16,16], index: 1, kind: input, shape index: {}]
  %s2 = inlined_call_operand.vmem [shape: f32[1,128], index: 2, kind: input, shape index: {}]
  %s3 = inlined_call_operand.vmem [shape: f32[1,128], index: 3, kind: input, shape index: {}]
  %s4 = inlined_call_operand.hbm [shape: bf16[2,128,384], index: 4, kind: input, shape index: {}]
  %s5 = inlined_call_operand.vmem [shape: f32[2,1,384], index: 5, kind: input, shape index: {}]
  %s6 = inlined_call_operand.vmem [shape: bf16[2,128,128], index: 6, kind: input, shape index: {}]
  %s7 = inlined_call_operand.vmem [shape: f32[2,1,128], index: 7, kind: input, shape index: {}]
  %s8 = inlined_call_operand.vmem [shape: f32[2,1,128], index: 8, kind: input, shape index: {}]
  %s9 = inlined_call_operand.vmem [shape: f32[2,1,128], index: 9, kind: input, shape index: {}]
  %s10 = inlined_call_operand.vmem [shape: bf16[2,128,256], index: 10, kind: input, shape index: {}]
  %s11 = inlined_call_operand.vmem [shape: f32[2,1,256], index: 11, kind: input, shape index: {}]
  %s12 = inlined_call_operand.hbm [shape: bf16[2,256,128], index: 12, kind: input, shape index: {}]
  %s13 = inlined_call_operand.vmem [shape: f32[2,1,128], index: 13, kind: input, shape index: {}]
  %s14 = inlined_call_operand.vmem [shape: f32[2,1,128], index: 14, kind: input, shape index: {}]
  %s15 = inlined_call_operand.vmem [shape: f32[2,1,128], index: 15, kind: input, shape index: {}]
  %s16 = inlined_call_operand.hbm [shape: bf16[128,128], index: 16, kind: input, shape index: {}]
  %s17 = inlined_call_operand.vmem [shape: f32[1,128], index: 17, kind: input, shape index: {}]
  %s18 = inlined_call_operand.hbm [shape: f32[2,128], index: 18, kind: output, shape index: {}]
  %s19 = sld [smem:[#allocation0]]
  $region125: #{_lambda_.1} parent=0
    _
  %s21 = ssub.s32 1, %s19
  %s22 = scalar_select 0, %s21, %s19
  $region1: #{_lambda_.1} parent=0
    #allocation4 [shape = 'u8[196608]{0}', space=vmem, size = 0x30000, scoped, tag = 'input window, operand 4']
    #allocation5 [shape = 's32[2]{0}', space=sflag, size = 0x8, scoped, tag = 'scoped memory for _lambda_.1']
    #allocation6 [shape = 's32[2]{0}', space=sflag, size = 0x8, scoped, tag = 'scoped memory for _lambda_.1']
    #allocation7 [shape = 'u8[131072]{0}', space=vmem, size = 0x20000, scoped, tag = 'input window, operand 12']
    #allocation8 [shape = 's32[2]{0}', space=sflag, size = 0x8, scoped, tag = 'scoped memory for _lambda_.1']
    #allocation9 [shape = 'u8[32768]{0}', space=vmem, size = 0x8000, scoped, tag = 'input window, operand 16, single buffered']
    #allocation10 [shape = 'u8[1024]{0}', space=vmem, size = 0x400, scoped, tag = 'output window, operand 0, single buffered']
    %23 = vsyncpa [#allocation5], 0
    %s24 = scalar_lea.sflag [#allocation5], 1
    %25 = vsyncpa %s24, 0
    %26 = vsyncpa [#allocation8], 0
    %s27 = scalar_lea.sflag [#allocation8], 1
    %28 = vsyncpa %s27, 0
    %29 = vsyncpa [#allocation6], 0
    loop: start=0, step=1, limit=4
    $region2: #{_lambda_.1} parent=1 // loop_pre_header
      _
    $region3: #{_lambda_.1} parent=1 // loop_header
      %s31 = sphi 0, %s35
      %p32 = scmp.ge.s32.totalorder %s31, 4
      %s39 = sphi 0, %s39
      %s41 = sphi 0, %s39
      %s42 = sphi 0, %s41
      %s56 = sphi 0, %s42
      %s60 = sphi 0, %s60
      %s62 = sphi 0, %s60
      %s63 = sphi 0, %s62
      %s77 = sphi 0, %s63
      %s81 = sphi 0, %s81
      %s83 = sphi 0, %s81
      %s84 = sphi 0, %s83
      %s98 = sphi 0, %s84
      %s102 = sphi 0, %s102
      %s104 = sphi 0, %s102
      %s105 = sphi 0, %s104
      %s119 = sphi 0, %s105
      %s125 = sphi 0, %s127
      %s128 = sphi 0, %s125
      %s129 = sphi 0, %s128
      %s145 = sphi 0, %s129
      %s151 = sphi 0, %s153
      %s154 = sphi 0, %s151
      %s155 = sphi 0, %s154
      %s171 = sphi 0, %s155
      %s177 = sphi 0, %s179
      %s180 = sphi 0, %s177
      %s181 = sphi 0, %s180
      %s197 = sphi 0, %s181
      %s203 = sphi 0, %s205
      %s206 = sphi 0, %s203
      %s207 = sphi 0, %s206
      %s223 = sphi 0, %s207
      %s229 = sphi 0, %s231
      %s232 = sphi 0, %s229
      %s233 = sphi 0, %s232
      %s249 = sphi 0, %s233
      %s255 = sphi 0, %s257
      %s258 = sphi 0, %s255
      %s259 = sphi 0, %s258
      %s275 = sphi 0, %s259
      %s281 = sphi 0, %s283
      %s284 = sphi 0, %s281
      %s285 = sphi 0, %s284
      %s301 = sphi 0, %s285
      %s307 = sphi 0, %s309
      %s310 = sphi 0, %s307
      %s311 = sphi 0, %s310
      %s327 = sphi 0, %s311
      %s333 = sphi 0, %s335
      %s336 = sphi 0, %s333
      %s337 = sphi 0, %s336
      %s353 = sphi 0, %s337
      %s359 = sphi 0, %s361
      %s362 = sphi 0, %s359
      %s363 = sphi 0, %s362
      %s379 = sphi 0, %s363
      %s385 = sphi 0, %s387
      %s388 = sphi 0, %s385
      %s389 = sphi 0, %s388
      %s405 = sphi 0, %s389
      %s411 = sphi 0, %s413
      %s414 = sphi 0, %s411
      %s415 = sphi 0, %s414
      %s431 = sphi 0, %s415
      %s435 = sphi 0, %s435
      %s437 = sphi 0, %s435
      %s438 = sphi 0, %s437
      %s452 = sphi 0, %s438
      %s456 = sphi 0, %s456
      %s458 = sphi 0, %s456
      %s459 = sphi 0, %s458
      %s473 = sphi 0, %s459
      %s477 = sphi 0, %s477
      %s479 = sphi 0, %s477
      %s480 = sphi 0, %s479
      %s494 = sphi 0, %s480
    $region4: #{_lambda_.1} parent=1 // loop_header_branch
      %34 = sbr.rel (%p32) target = $region8
    $region5: #{_lambda_.1} parent=1 // loop_body
      %s36 = ssub.s32 %s31, 1
      %s37 = ssub.s32 %s31, 2
      %s38 = sadd.s32 %s31, 1
      %s40 = sadd.s32 %s39, 1
      %p43 = scmp.eq.s32.totalorder %s31, 1
      %p44 = scmp.ne.s32.totalorder %s39, %s41
      %p45 = scmp.eq.s32.totalorder %s31, 0
      %p46 = por %p44, %p45
      %p47 = scmp.ne.s32.totalorder %s39, %s41
      %p48 = scmp.eq.s32.totalorder %s36, 1
      %p49 = por %p47, %p48
      %p50 = scmp.ne.s32.totalorder %s41, %s42
      %p51 = scmp.eq.s32.totalorder %s36, 0
      %p52 = por %p50, %p51
      %p53 = scmp.ne.s32.totalorder %s41, %s42
      %p54 = scmp.eq.s32.totalorder %s37, 1
      %p55 = por %p53, %p54
      %p57 = scmp.ne.s32.totalorder %s42, %s56
      %p58 = scmp.eq.s32.totalorder %s37, 0
      %p59 = por %p57, %p58
      %s61 = sadd.s32 %s60, 1
      %p64 = scmp.eq.s32.totalorder %s31, 1
      %p65 = scmp.ne.s32.totalorder %s60, %s62
      %p66 = scmp.eq.s32.totalorder %s31, 0
      %p67 = por %p65, %p66
      %p68 = scmp.ne.s32.totalorder %s60, %s62
      %p69 = scmp.eq.s32.totalorder %s36, 1
      %p70 = por %p68, %p69
      %p71 = scmp.ne.s32.totalorder %s62, %s63
      %p72 = scmp.eq.s32.totalorder %s36, 0
      %p73 = por %p71, %p72
      %p74 = scmp.ne.s32.totalorder %s62, %s63
      %p75 = scmp.eq.s32.totalorder %s37, 1
      %p76 = por %p74, %p75
      %p78 = scmp.ne.s32.totalorder %s63, %s77
      %p79 = scmp.eq.s32.totalorder %s37, 0
      %p80 = por %p78, %p79
      %s82 = sadd.s32 %s81, 1
      %p85 = scmp.eq.s32.totalorder %s31, 1
      %p86 = scmp.ne.s32.totalorder %s81, %s83
      %p87 = scmp.eq.s32.totalorder %s31, 0
      %p88 = por %p86, %p87
      %p89 = scmp.ne.s32.totalorder %s81, %s83
      %p90 = scmp.eq.s32.totalorder %s36, 1
      %p91 = por %p89, %p90
      %p92 = scmp.ne.s32.totalorder %s83, %s84
      %p93 = scmp.eq.s32.totalorder %s36, 0
      %p94 = por %p92, %p93
      %p95 = scmp.ne.s32.totalorder %s83, %s84
      %p96 = scmp.eq.s32.totalorder %s37, 1
      %p97 = por %p95, %p96
      %p99 = scmp.ne.s32.totalorder %s84, %s98
      %p100 = scmp.eq.s32.totalorder %s37, 0
      %p101 = por %p99, %p100
      %s103 = sadd.s32 %s102, 1
      %p106 = scmp.eq.s32.totalorder %s31, 1
      %p107 = scmp.ne.s32.totalorder %s102, %s104
      %p108 = scmp.eq.s32.totalorder %s31, 0
      %p109 = por %p107, %p108
      %p110 = scmp.ne.s32.totalorder %s102, %s104
      %p111 = scmp.eq.s32.totalorder %s36, 1
      %p112 = por %p110, %p111
      %p113 = scmp.ne.s32.totalorder %s104, %s105
      %p114 = scmp.eq.s32.totalorder %s36, 0
      %p115 = por %p113, %p114
      %p116 = scmp.ne.s32.totalorder %s104, %s105
      %p117 = scmp.eq.s32.totalorder %s37, 1
      %p118 = por %p116, %p117
      %p120 = scmp.ne.s32.totalorder %s105, %s119
      %p121 = scmp.eq.s32.totalorder %s37, 0
      %p122 = por %p120, %p121
      %s123 = ssub.s32 %s31, %s38
      %p124 = scmp.eq.s32.totalorder %s123, 0
      %s126 = sadd.s32 %s125, 1
      %s127 = scalar_select %p124, %s125, %s126
      %p130 = pneg %p124
      %p131 = scmp.eq.s32.totalorder %s31, 1
      %p132 = por %p130, %p131
      %p133 = scmp.ne.s32.totalorder %s125, %s128
      %p134 = scmp.eq.s32.totalorder %s31, 0
      %p135 = por %p133, %p134
      %p136 = scmp.ne.s32.totalorder %s125, %s128
      %p137 = scmp.eq.s32.totalorder %s36, 1
      %p138 = por %p136, %p137
      %p139 = scmp.ne.s32.totalorder %s128, %s129
      %p140 = scmp.eq.s32.totalorder %s36, 0
      %p141 = por %p139, %p140
      %p142 = scmp.ne.s32.totalorder %s128, %s129
      %p143 = scmp.eq.s32.totalorder %s37, 1
      %p144 = por %p142, %p143
      %p146 = scmp.ne.s32.totalorder %s129, %s145
      %p147 = scmp.eq.s32.totalorder %s37, 0
      %p148 = por %p146, %p147
      %s149 = ssub.s32 %s31, %s38
      %p150 = scmp.eq.s32.totalorder %s149, 0
      %s152 = sadd.s32 %s151, 1
      %s153 = scalar_select %p150, %s151, %s152
      %p156 = pneg %p150
      %p157 = scmp.eq.s32.totalorder %s31, 1
      %p158 = por %p156, %p157
      %p159 = scmp.ne.s32.totalorder %s151, %s154
      %p160 = scmp.eq.s32.totalorder %s31, 0
      %p161 = por %p159, %p160
      %p162 = scmp.ne.s32.totalorder %s151, %s154
      %p163 = scmp.eq.s32.totalorder %s36, 1
      %p164 = por %p162, %p163
      %p165 = scmp.ne.s32.totalorder %s154, %s155
      %p166 = scmp.eq.s32.totalorder %s36, 0
      %p167 = por %p165, %p166
      %p168 = scmp.ne.s32.totalorder %s154, %s155
      %p169 = scmp.eq.s32.totalorder %s37, 1
      %p170 = por %p168, %p169
      %p172 = scmp.ne.s32.totalorder %s155, %s171
      %p173 = scmp.eq.s32.totalorder %s37, 0
      %p174 = por %p172, %p173
      %s175 = ssub.s32 %s31, %s38
      %p176 = scmp.eq.s32.totalorder %s175, 0
      %s178 = sadd.s32 %s177, 1
      %s179 = scalar_select %p176, %s177, %s178
      %p182 = pneg %p176
      %p183 = scmp.eq.s32.totalorder %s31, 1
      %p184 = por %p182, %p183
      %p185 = scmp.ne.s32.totalorder %s177, %s180
      %p186 = scmp.eq.s32.totalorder %s31, 0
      %p187 = por %p185, %p186
      %p188 = scmp.ne.s32.totalorder %s177, %s180
      %p189 = scmp.eq.s32.totalorder %s36, 1
      %p190 = por %p188, %p189
      %p191 = scmp.ne.s32.totalorder %s180, %s181
      %p192 = scmp.eq.s32.totalorder %s36, 0
      %p193 = por %p191, %p192
      %p194 = scmp.ne.s32.totalorder %s180, %s181
      %p195 = scmp.eq.s32.totalorder %s37, 1
      %p196 = por %p194, %p195
      %p198 = scmp.ne.s32.totalorder %s181, %s197
      %p199 = scmp.eq.s32.totalorder %s37, 0
      %p200 = por %p198, %p199
      %s201 = ssub.s32 %s31, %s38
      %p202 = scmp.eq.s32.totalorder %s201, 0
      %s204 = sadd.s32 %s203, 1
      %s205 = scalar_select %p202, %s203, %s204
      %p208 = pneg %p202
      %p209 = scmp.eq.s32.totalorder %s31, 1
      %p210 = por %p208, %p209
      %p211 = scmp.ne.s32.totalorder %s203, %s206
      %p212 = scmp.eq.s32.totalorder %s31, 0
      %p213 = por %p211, %p212
      %p214 = scmp.ne.s32.totalorder %s203, %s206
      %p215 = scmp.eq.s32.totalorder %s36, 1
      %p216 = por %p214, %p215
      %p217 = scmp.ne.s32.totalorder %s206, %s207
      %p218 = scmp.eq.s32.totalorder %s36, 0
      %p219 = por %p217, %p218
      %p220 = scmp.ne.s32.totalorder %s206, %s207
      %p221 = scmp.eq.s32.totalorder %s37, 1
      %p222 = por %p220, %p221
      %p224 = scmp.ne.s32.totalorder %s207, %s223
      %p225 = scmp.eq.s32.totalorder %s37, 0
      %p226 = por %p224, %p225
      %s227 = ssub.s32 %s31, %s38
      %p228 = scmp.eq.s32.totalorder %s227, 0
      %s230 = sadd.s32 %s229, 1
      %s231 = scalar_select %p228, %s229, %s230
      %p234 = pneg %p228
      %p235 = scmp.eq.s32.totalorder %s31, 1
      %p236 = por %p234, %p235
      %p237 = scmp.ne.s32.totalorder %s229, %s232
      %p238 = scmp.eq.s32.totalorder %s31, 0
      %p239 = por %p237, %p238
      %p240 = scmp.ne.s32.totalorder %s229, %s232
      %p241 = scmp.eq.s32.totalorder %s36, 1
      %p242 = por %p240, %p241
      %p243 = scmp.ne.s32.totalorder %s232, %s233
      %p244 = scmp.eq.s32.totalorder %s36, 0
      %p245 = por %p243, %p244
      %p246 = scmp.ne.s32.totalorder %s232, %s233
      %p247 = scmp.eq.s32.totalorder %s37, 1
      %p248 = por %p246, %p247
      %p250 = scmp.ne.s32.totalorder %s233, %s249
      %p251 = scmp.eq.s32.totalorder %s37, 0
      %p252 = por %p250, %p251
      %s253 = ssub.s32 %s31, %s38
      %p254 = scmp.eq.s32.totalorder %s253, 0
      %s256 = sadd.s32 %s255, 1
      %s257 = scalar_select %p254, %s255, %s256
      %p260 = pneg %p254
      %p261 = scmp.eq.s32.totalorder %s31, 1
      %p262 = por %p260, %p261
      %p263 = scmp.ne.s32.totalorder %s255, %s258
      %p264 = scmp.eq.s32.totalorder %s31, 0
      %p265 = por %p263, %p264
      %p266 = scmp.ne.s32.totalorder %s255, %s258
      %p267 = scmp.eq.s32.totalorder %s36, 1
      %p268 = por %p266, %p267
      %p269 = scmp.ne.s32.totalorder %s258, %s259
      %p270 = scmp.eq.s32.totalorder %s36, 0
      %p271 = por %p269, %p270
      %p272 = scmp.ne.s32.totalorder %s258, %s259
      %p273 = scmp.eq.s32.totalorder %s37, 1
      %p274 = por %p272, %p273
      %p276 = scmp.ne.s32.totalorder %s259, %s275
      %p277 = scmp.eq.s32.totalorder %s37, 0
      %p278 = por %p276, %p277
      %s279 = ssub.s32 %s31, %s38
      %p280 = scmp.eq.s32.totalorder %s279, 0
      %s282 = sadd.s32 %s281, 1
      %s283 = scalar_select %p280, %s281, %s282
      %p286 = pneg %p280
      %p287 = scmp.eq.s32.totalorder %s31, 1
      %p288 = por %p286, %p287
      %p289 = scmp.ne.s32.totalorder %s281, %s284
      %p290 = scmp.eq.s32.totalorder %s31, 0
      %p291 = por %p289, %p290
      %p292 = scmp.ne.s32.totalorder %s281, %s284
      %p293 = scmp.eq.s32.totalorder %s36, 1
      %p294 = por %p292, %p293
      %p295 = scmp.ne.s32.totalorder %s284, %s285
      %p296 = scmp.eq.s32.totalorder %s36, 0
      %p297 = por %p295, %p296
      %p298 = scmp.ne.s32.totalorder %s284, %s285
      %p299 = scmp.eq.s32.totalorder %s37, 1
      %p300 = por %p298, %p299
      %p302 = scmp.ne.s32.totalorder %s285, %s301
      %p303 = scmp.eq.s32.totalorder %s37, 0
      %p304 = por %p302, %p303
      %s305 = ssub.s32 %s31, %s38
      %p306 = scmp.eq.s32.totalorder %s305, 0
      %s308 = sadd.s32 %s307, 1
      %s309 = scalar_select %p306, %s307, %s308
      %p312 = pneg %p306
      %p313 = scmp.eq.s32.totalorder %s31, 1
      %p314 = por %p312, %p313
      %p315 = scmp.ne.s32.totalorder %s307, %s310
      %p316 = scmp.eq.s32.totalorder %s31, 0
      %p317 = por %p315, %p316
      %p318 = scmp.ne.s32.totalorder %s307, %s310
      %p319 = scmp.eq.s32.totalorder %s36, 1
      %p320 = por %p318, %p319
      %p321 = scmp.ne.s32.totalorder %s310, %s311
      %p322 = scmp.eq.s32.totalorder %s36, 0
      %p323 = por %p321, %p322
      %p324 = scmp.ne.s32.totalorder %s310, %s311
      %p325 = scmp.eq.s32.totalorder %s37, 1
      %p326 = por %p324, %p325
      %p328 = scmp.ne.s32.totalorder %s311, %s327
      %p329 = scmp.eq.s32.totalorder %s37, 0
      %p330 = por %p328, %p329
      %s331 = ssub.s32 %s31, %s38
      %p332 = scmp.eq.s32.totalorder %s331, 0
      %s334 = sadd.s32 %s333, 1
      %s335 = scalar_select %p332, %s333, %s334
      %p338 = pneg %p332
      %p339 = scmp.eq.s32.totalorder %s31, 1
      %p340 = por %p338, %p339
      %p341 = scmp.ne.s32.totalorder %s333, %s336
      %p342 = scmp.eq.s32.totalorder %s31, 0
      %p343 = por %p341, %p342
      %p344 = scmp.ne.s32.totalorder %s333, %s336
      %p345 = scmp.eq.s32.totalorder %s36, 1
      %p346 = por %p344, %p345
      %p347 = scmp.ne.s32.totalorder %s336, %s337
      %p348 = scmp.eq.s32.totalorder %s36, 0
      %p349 = por %p347, %p348
      %p350 = scmp.ne.s32.totalorder %s336, %s337
      %p351 = scmp.eq.s32.totalorder %s37, 1
      %p352 = por %p350, %p351
      %p354 = scmp.ne.s32.totalorder %s337, %s353
      %p355 = scmp.eq.s32.totalorder %s37, 0
      %p356 = por %p354, %p355
      %s357 = ssub.s32 %s31, %s38
      %p358 = scmp.eq.s32.totalorder %s357, 0
      %s360 = sadd.s32 %s359, 1
      %s361 = scalar_select %p358, %s359, %s360
      %p364 = pneg %p358
      %p365 = scmp.eq.s32.totalorder %s31, 1
      %p366 = por %p364, %p365
      %p367 = scmp.ne.s32.totalorder %s359, %s362
      %p368 = scmp.eq.s32.totalorder %s31, 0
      %p369 = por %p367, %p368
      %p370 = scmp.ne.s32.totalorder %s359, %s362
      %p371 = scmp.eq.s32.totalorder %s36, 1
      %p372 = por %p370, %p371
      %p373 = scmp.ne.s32.totalorder %s362, %s363
      %p374 = scmp.eq.s32.totalorder %s36, 0
      %p375 = por %p373, %p374
      %p376 = scmp.ne.s32.totalorder %s362, %s363
      %p377 = scmp.eq.s32.totalorder %s37, 1
      %p378 = por %p376, %p377
      %p380 = scmp.ne.s32.totalorder %s363, %s379
      %p381 = scmp.eq.s32.totalorder %s37, 0
      %p382 = por %p380, %p381
      %s383 = ssub.s32 %s31, %s38
      %p384 = scmp.eq.s32.totalorder %s383, 0
      %s386 = sadd.s32 %s385, 1
      %s387 = scalar_select %p384, %s385, %s386
      %p390 = pneg %p384
      %p391 = scmp.eq.s32.totalorder %s31, 1
      %p392 = por %p390, %p391
      %p393 = scmp.ne.s32.totalorder %s385, %s388
      %p394 = scmp.eq.s32.totalorder %s31, 0
      %p395 = por %p393, %p394
      %p396 = scmp.ne.s32.totalorder %s385, %s388
      %p397 = scmp.eq.s32.totalorder %s36, 1
      %p398 = por %p396, %p397
      %p399 = scmp.ne.s32.totalorder %s388, %s389
      %p400 = scmp.eq.s32.totalorder %s36, 0
      %p401 = por %p399, %p400
      %p402 = scmp.ne.s32.totalorder %s388, %s389
      %p403 = scmp.eq.s32.totalorder %s37, 1
      %p404 = por %p402, %p403
      %p406 = scmp.ne.s32.totalorder %s389, %s405
      %p407 = scmp.eq.s32.totalorder %s37, 0
      %p408 = por %p406, %p407
      %s409 = ssub.s32 %s31, %s38
      %p410 = scmp.eq.s32.totalorder %s409, 0
      %s412 = sadd.s32 %s411, 1
      %s413 = scalar_select %p410, %s411, %s412
      %p416 = pneg %p410
      %p417 = scmp.eq.s32.totalorder %s31, 1
      %p418 = por %p416, %p417
      %p419 = scmp.ne.s32.totalorder %s411, %s414
      %p420 = scmp.eq.s32.totalorder %s31, 0
      %p421 = por %p419, %p420
      %p422 = scmp.ne.s32.totalorder %s411, %s414
      %p423 = scmp.eq.s32.totalorder %s36, 1
      %p424 = por %p422, %p423
      %p425 = scmp.ne.s32.totalorder %s414, %s415
      %p426 = scmp.eq.s32.totalorder %s36, 0
      %p427 = por %p425, %p426
      %p428 = scmp.ne.s32.totalorder %s414, %s415
      %p429 = scmp.eq.s32.totalorder %s37, 1
      %p430 = por %p428, %p429
      %p432 = scmp.ne.s32.totalorder %s415, %s431
      %p433 = scmp.eq.s32.totalorder %s37, 0
      %p434 = por %p432, %p433
      %s436 = sadd.s32 %s435, 1
      %p439 = scmp.eq.s32.totalorder %s31, 1
      %p440 = scmp.ne.s32.totalorder %s435, %s437
      %p441 = scmp.eq.s32.totalorder %s31, 0
      %p442 = por %p440, %p441
      %p443 = scmp.ne.s32.totalorder %s435, %s437
      %p444 = scmp.eq.s32.totalorder %s36, 1
      %p445 = por %p443, %p444
      %p446 = scmp.ne.s32.totalorder %s437, %s438
      %p447 = scmp.eq.s32.totalorder %s36, 0
      %p448 = por %p446, %p447
      %p449 = scmp.ne.s32.totalorder %s437, %s438
      %p450 = scmp.eq.s32.totalorder %s37, 1
      %p451 = por %p449, %p450
      %p453 = scmp.ne.s32.totalorder %s438, %s452
      %p454 = scmp.eq.s32.totalorder %s37, 0
      %p455 = por %p453, %p454
      %s457 = sadd.s32 %s456, 1
      %p460 = scmp.eq.s32.totalorder %s31, 1
      %p461 = scmp.ne.s32.totalorder %s456, %s458
      %p462 = scmp.eq.s32.totalorder %s31, 0
      %p463 = por %p461, %p462
      %p464 = scmp.ne.s32.totalorder %s456, %s458
      %p465 = scmp.eq.s32.totalorder %s36, 1
      %p466 = por %p464, %p465
      %p467 = scmp.ne.s32.totalorder %s458, %s459
      %p468 = scmp.eq.s32.totalorder %s36, 0
      %p469 = por %p467, %p468
      %p470 = scmp.ne.s32.totalorder %s458, %s459
      %p471 = scmp.eq.s32.totalorder %s37, 1
      %p472 = por %p470, %p471
      %p474 = scmp.ne.s32.totalorder %s459, %s473
      %p475 = scmp.eq.s32.totalorder %s37, 0
      %p476 = por %p474, %p475
      %s478 = sadd.s32 %s477, 1
      %p481 = scmp.eq.s32.totalorder %s31, 1
      %p482 = scmp.ne.s32.totalorder %s477, %s479
      %p483 = scmp.eq.s32.totalorder %s31, 0
      %p484 = por %p482, %p483
      %p485 = scmp.ne.s32.totalorder %s477, %s479
      %p486 = scmp.eq.s32.totalorder %s36, 1
      %p487 = por %p485, %p486
      %p488 = scmp.ne.s32.totalorder %s479, %s480
      %p489 = scmp.eq.s32.totalorder %s36, 0
      %p490 = por %p488, %p489
      %p491 = scmp.ne.s32.totalorder %s479, %s480
      %p492 = scmp.eq.s32.totalorder %s37, 1
      %p493 = por %p491, %p492
      %p495 = scmp.ne.s32.totalorder %s480, %s494
      %p496 = scmp.eq.s32.totalorder %s37, 0
      %p497 = por %p495, %p496
      %p498 = scmp.le.s32.totalorder 1, %s31
      %p499 = scmp.lt.s32.totalorder %s31, 3
      %p500 = pnand %p498, %p499
      %p501 = pneg %p500
      // Predicated region
      $region9: #{_lambda_.1} parent=5 // pred_check
        _
      $region10: #{_lambda_.1} parent=5 // pred_check_branch
        %503 = sbr.rel (%p500) target = $region12
      $region11: #{_lambda_.1} parent=5 // pred_region
        %s504 = ssub.s32 %s31, 1
        // Predicated region
        $region13: #{_lambda_.1} parent=11 // pred_check
          %p505 = pneg %p52
        $region14: #{_lambda_.1} parent=11 // pred_check_branch
          %507 = sbr.rel (%p505) target = $region16
        $region15: #{_lambda_.1} parent=11 // pred_region
          _
        $region16: #{_lambda_.1} parent=11 // pred_fallthru
          _
        // Predicated region
        $region17: #{_lambda_.1} parent=11 // pred_check
          %p508 = pneg %p73
        $region18: #{_lambda_.1} parent=11 // pred_check_branch
          %510 = sbr.rel (%p508) target = $region20
        $region19: #{_lambda_.1} parent=11 // pred_region
          _
        $region20: #{_lambda_.1} parent=11 // pred_fallthru
          _
        // Predicated region
        $region21: #{_lambda_.1} parent=11 // pred_check
          %p511 = pneg %p94
        $region22: #{_lambda_.1} parent=11 // pred_check_branch
          %513 = sbr.rel (%p511) target = $region24
        $region23: #{_lambda_.1} parent=11 // pred_region
          _
        $region24: #{_lambda_.1} parent=11 // pred_fallthru
          _
        // Predicated region
        $region25: #{_lambda_.1} parent=11 // pred_check
          %p514 = pneg %p115
        $region26: #{_lambda_.1} parent=11 // pred_check_branch
          %516 = sbr.rel (%p514) target = $region28
        $region27: #{_lambda_.1} parent=11 // pred_region
          _
        $region28: #{_lambda_.1} parent=11 // pred_fallthru
          _
        // Predicated region
        $region29: #{_lambda_.1} parent=11 // pred_check
          %p517 = pneg %p448
        $region30: #{_lambda_.1} parent=11 // pred_check_branch
          %519 = sbr.rel (%p517) target = $region32
        $region31: #{_lambda_.1} parent=11 // pred_region
          %s521 = ssub.s32 1024, 1024
          %522 = vsyncadd [#allocation8], %s521
          %s523 = sshll.u32 [#allocation9], 4
          %s524 = int_to_ptr.vmem [resolvable:$true] %s523
          %529 = dma.hbm_to_vmem [thread:$0]  %s16, 1024, %s524, [#allocation8], 64, 64, 4
        $region32: #{_lambda_.1} parent=11 // pred_fallthru
          _
        // Predicated region
        $region33: #{_lambda_.1} parent=11 // pred_check
          %p530 = pneg %p469
        $region34: #{_lambda_.1} parent=11 // pred_check_branch
          %532 = sbr.rel (%p530) target = $region36
        $region35: #{_lambda_.1} parent=11 // pred_region
          _
        $region36: #{_lambda_.1} parent=11 // pred_fallthru
          _
      $region12: #{_lambda_.1} parent=5 // pred_fallthru
        _
      %p533 = scmp.lt.s32.totalorder %s31, 2
      // Predicated region
      $region37: #{_lambda_.1} parent=5 // pred_check
        %p534 = pneg %p533
      $region38: #{_lambda_.1} parent=5 // pred_check_branch
        %536 = sbr.rel (%p534) target = $region40
      $region39: #{_lambda_.1} parent=5 // pred_region
        // Predicated region
        $region41: #{_lambda_.1} parent=39 // pred_check
          %p537 = pneg %p135
        $region42: #{_lambda_.1} parent=39 // pred_check_branch
          %539 = sbr.rel (%p537) target = $region44
        $region43: #{_lambda_.1} parent=39 // pred_region
          %s540 = sand.u32 %s125, 1
          %s541 = scalar_lea.sflag [#allocation5], %s540
          %s542 = sand.u32 %s125, 1
          %s543 = smul.addr %s542, 192
          %s544 = scalar_lea.vmem [#allocation4], %s543
          %s546 = ssub.s32 3072, 3072
          %547 = vsyncadd %s541, %s546
          %s548 = smul.addr %s31, 48
          %s549 = smul.addr %s548, 64
          %s550 = scalar_lea.hbm %s4, %s549
          %s551 = sshll.u32 %s544, 4
          %s552 = int_to_ptr.vmem [resolvable:$true] %s551
          %557 = dma.hbm_to_vmem [thread:$0]  %s550, 3072, %s552, %s541, 192, 192, 12
        $region44: #{_lambda_.1} parent=39 // pred_fallthru
          _
        // Predicated region
        $region45: #{_lambda_.1} parent=39 // pred_check
          %p558 = pneg %p161
        $region46: #{_lambda_.1} parent=39 // pred_check_branch
          %560 = sbr.rel (%p558) target = $region48
        $region47: #{_lambda_.1} parent=39 // pred_region
          %p561 = scmp.lt.s32.totalorder %s31, 1
          %s562 = scalar_select %p561, %s31, 1
          %s563 = smul.addr %s562, 3
          %s564 = scalar_lea.vmem %s5, %s563
        $region48: #{_lambda_.1} parent=39 // pred_fallthru
          _
        // Predicated region
        $region49: #{_lambda_.1} parent=39 // pred_check
          %p565 = pneg %p187
        $region50: #{_lambda_.1} parent=39 // pred_check_branch
          %567 = sbr.rel (%p565) target = $region52
        $region51: #{_lambda_.1} parent=39 // pred_region
          %p568 = scmp.lt.s32.totalorder %s31, 1
          %s569 = scalar_select %p568, %s31, 1
          %s570 = smul.addr %s569, 16
          %s571 = smul.addr %s570, 4
          %s572 = scalar_lea.vmem %s6, %s571
        $region52: #{_lambda_.1} parent=39 // pred_fallthru
          _
        // Predicated region
        $region53: #{_lambda_.1} parent=39 // pred_check
          %p573 = pneg %p213
        $region54: #{_lambda_.1} parent=39 // pred_check_branch
          %575 = sbr.rel (%p573) target = $region56
        $region55: #{_lambda_.1} parent=39 // pred_region
          %p576 = scmp.lt.s32.totalorder %s31, 1
          %s577 = scalar_select %p576, %s31, 1
          %s578 = scalar_lea.vmem %s7, %s577
        $region56: #{_lambda_.1} parent=39 // pred_fallthru
          _
        // Predicated region
        $region57: #{_lambda_.1} parent=39 // pred_check
          %p579 = pneg %p239
        $region58: #{_lambda_.1} parent=39 // pred_check_branch
          %581 = sbr.rel (%p579) target = $region60
        $region59: #{_lambda_.1} parent=39 // pred_region
          %p582 = scmp.lt.s32.totalorder %s31, 1
          %s583 = scalar_select %p582, %s31, 1
          %s584 = scalar_lea.vmem %s8, %s583
        $region60: #{_lambda_.1} parent=39 // pred_fallthru
          _
        // Predicated region
        $region61: #{_lambda_.1} parent=39 // pred_check
          %p585 = pneg %p265
        $region62: #{_lambda_.1} parent=39 // pred_check_branch
          %587 = sbr.rel (%p585) target = $region64
        $region63: #{_lambda_.1} parent=39 // pred_region
          %p588 = scmp.lt.s32.totalorder %s31, 1
          %s589 = scalar_select %p588, %s31, 1
          %s590 = scalar_lea.vmem %s9, %s589
        $region64: #{_lambda_.1} parent=39 // pred_fallthru
          _
        // Predicated region
        $region65: #{_lambda_.1} parent=39 // pred_check
          %p591 = pneg %p291
        $region66: #{_lambda_.1} parent=39 // pred_check_branch
          %593 = sbr.rel (%p591) target = $region68
        $region67: #{_lambda_.1} parent=39 // pred_region
          %p594 = scmp.lt.s32.totalorder %s31, 1
          %s595 = scalar_select %p594, %s31, 1
          %s596 = smul.addr %s595, 32
          %s597 = smul.addr %s596, 4
          %s598 = scalar_lea.vmem %s10, %s597
        $region68: #{_lambda_.1} parent=39 // pred_fallthru
          _
        // Predicated region
        $region69: #{_lambda_.1} parent=39 // pred_check
          %p599 = pneg %p317
        $region70: #{_lambda_.1} parent=39 // pred_check_branch
          %601 = sbr.rel (%p599) target = $region72
        $region71: #{_lambda_.1} parent=39 // pred_region
          %p602 = scmp.lt.s32.totalorder %s31, 1
          %s603 = scalar_select %p602, %s31, 1
          %s604 = smul.addr %s603, 2
          %s605 = scalar_lea.vmem %s11, %s604
        $region72: #{_lambda_.1} parent=39 // pred_fallthru
          _
        // Predicated region
        $region73: #{_lambda_.1} parent=39 // pred_check
          %p606 = pneg %p343
        $region74: #{_lambda_.1} parent=39 // pred_check_branch
          %608 = sbr.rel (%p606) target = $region76
        $region75: #{_lambda_.1} parent=39 // pred_region
          %s609 = sand.u32 %s31, 1
          %s610 = scalar_lea.sflag [#allocation8], %s609
          %s611 = sand.u32 %s333, 1
          %s612 = smul.addr %s611, 128
          %s613 = scalar_lea.vmem [#allocation7], %s612
          %s615 = ssub.s32 2048, 2048
          %616 = vsyncadd %s610, %s615
          %s617 = smul.addr %s31, 32
          %s618 = smul.addr %s617, 64
          %s619 = scalar_lea.hbm %s12, %s618
          %s620 = sshll.u32 %s613, 4
          %s621 = int_to_ptr.vmem [resolvable:$true] %s620
          %626 = dma.hbm_to_vmem [thread:$0]  %s619, 2048, %s621, %s610, 64, 64, 4
        $region76: #{_lambda_.1} parent=39 // pred_fallthru
          _
        // Predicated region
        $region77: #{_lambda_.1} parent=39 // pred_check
          %p627 = pneg %p369
        $region78: #{_lambda_.1} parent=39 // pred_check_branch
          %629 = sbr.rel (%p627) target = $region80
        $region79: #{_lambda_.1} parent=39 // pred_region
          %p630 = scmp.lt.s32.totalorder %s31, 1
          %s631 = scalar_select %p630, %s31, 1
          %s632 = scalar_lea.vmem %s13, %s631
        $region80: #{_lambda_.1} parent=39 // pred_fallthru
          _
        // Predicated region
        $region81: #{_lambda_.1} parent=39 // pred_check
          %p633 = pneg %p395
        $region82: #{_lambda_.1} parent=39 // pred_check_branch
          %635 = sbr.rel (%p633) target = $region84
        $region83: #{_lambda_.1} parent=39 // pred_region
          %p636 = scmp.lt.s32.totalorder %s31, 1
          %s637 = scalar_select %p636, %s31, 1
          %s638 = scalar_lea.vmem %s14, %s637
        $region84: #{_lambda_.1} parent=39 // pred_fallthru
          _
        // Predicated region
        $region85: #{_lambda_.1} parent=39 // pred_check
          %p639 = pneg %p421
        $region86: #{_lambda_.1} parent=39 // pred_check_branch
          %641 = sbr.rel (%p639) target = $region88
        $region87: #{_lambda_.1} parent=39 // pred_region
          %p642 = scmp.lt.s32.totalorder %s31, 1
          %s643 = scalar_select %p642, %s31, 1
          %s644 = scalar_lea.vmem %s15, %s643
        $region88: #{_lambda_.1} parent=39 // pred_fallthru
          _
      $region40: #{_lambda_.1} parent=5 // pred_fallthru
        _
      %p645 = scmp.le.s32.totalorder 1, %s31
      %p646 = scmp.lt.s32.totalorder %s31, 3
      %p647 = pnand %p645, %p646
      %p648 = pneg %p647
      // Predicated region
      $region89: #{_lambda_.1} parent=5 // pred_check
        _
      $region90: #{_lambda_.1} parent=5 // pred_check_branch
        %650 = sbr.rel (%p647) target = $region92
      $region91: #{_lambda_.1} parent=5 // pred_region
        %s651 = ssub.s32 %s31, 1
        %s652 = sand.u32 %s128, 1
        %s653 = scalar_lea.sflag [#allocation5], %s652
        %s654 = sand.u32 %s128, 1
        %s655 = smul.addr %s654, 192
        %s656 = scalar_lea.vmem [#allocation4], %s655
        // Predicated region
        $region93: #{_lambda_.1} parent=91 // pred_check
          %p657 = pneg %p141
        $region94: #{_lambda_.1} parent=91 // pred_check_branch
          %659 = sbr.rel (%p657) target = $region96
        $region95: #{_lambda_.1} parent=91 // pred_region
          %660 = dma.done %s653, 3072
        $region96: #{_lambda_.1} parent=91 // pred_fallthru
          _
        %s661 = sand.u32 %s36, 1
        %s662 = scalar_lea.sflag [#allocation8], %s661
        %s663 = sand.u32 %s336, 1
        %s664 = smul.addr %s663, 128
        %s665 = scalar_lea.vmem [#allocation7], %s664
        // Predicated region
        $region97: #{_lambda_.1} parent=91 // pred_check
          %p666 = pneg %p349
        $region98: #{_lambda_.1} parent=91 // pred_check_branch
          %668 = sbr.rel (%p666) target = $region100
        $region99: #{_lambda_.1} parent=91 // pred_region
          %669 = dma.done %s662, 2048
        $region100: #{_lambda_.1} parent=91 // pred_fallthru
          _
        // Predicated region
        $region101: #{_lambda_.1} parent=91 // pred_check
          %p670 = pneg %p448
        $region102: #{_lambda_.1} parent=91 // pred_check_branch
          %672 = sbr.rel (%p670) target = $region104
        $region103: #{_lambda_.1} parent=91 // pred_region
          %673 = dma.done [#allocation8], 1024
        $region104: #{_lambda_.1} parent=91 // pred_fallthru
          _
        %p674 = pneg %p52
        %p675 = pneg %p49
        %p676 = pneg %p73
        %p677 = pneg %p70
        %p678 = pneg %p94
        %p679 = pneg %p91
        %p680 = pneg %p115
        %p681 = pneg %p112
        %s682 = sand.u32 %s128, 1
        %s683 = scalar_lea.sflag [#allocation5], %s682
        %s684 = sand.u32 %s128, 1
        %s685 = smul.addr %s684, 192
        %s686 = scalar_lea.vmem [#allocation4], %s685
        %p687 = pneg %p141
        %p688 = pneg %p138
        %p689 = scmp.lt.s32.totalorder %s36, 1
        %s690 = scalar_select %p689, %s36, 1
        %s691 = smul.addr %s690, 3
        %s692 = scalar_lea.vmem %s5, %s691
        %p693 = pneg %p167
        %p694 = pneg %p164
        %p695 = scmp.lt.s32.totalorder %s36, 1
        %s696 = scalar_select %p695, %s36, 1
        %s697 = smul.addr %s696, 16
        %s698 = smul.addr %s697, 4
        %s699 = scalar_lea.vmem %s6, %s698
        %p700 = pneg %p193
        %p701 = pneg %p190
        %p702 = scmp.lt.s32.totalorder %s36, 1
        %s703 = scalar_select %p702, %s36, 1
        %s704 = scalar_lea.vmem %s7, %s703
        %p705 = pneg %p219
        %p706 = pneg %p216
        %p707 = scmp.lt.s32.totalorder %s36, 1
        %s708 = scalar_select %p707, %s36, 1
        %s709 = scalar_lea.vmem %s8, %s708
        %p710 = pneg %p245
        %p711 = pneg %p242
        %p712 = scmp.lt.s32.totalorder %s36, 1
        %s713 = scalar_select %p712, %s36, 1
        %s714 = scalar_lea.vmem %s9, %s713
        %p715 = pneg %p271
        %p716 = pneg %p268
        %p717 = scmp.lt.s32.totalorder %s36, 1
        %s718 = scalar_select %p717, %s36, 1
        %s719 = smul.addr %s718, 32
        %s720 = smul.addr %s719, 4
        %s721 = scalar_lea.vmem %s10, %s720
        %p722 = pneg %p297
        %p723 = pneg %p294
        %p724 = scmp.lt.s32.totalorder %s36, 1
        %s725 = scalar_select %p724, %s36, 1
        %s726 = smul.addr %s725, 2
        %s727 = scalar_lea.vmem %s11, %s726
        %p728 = pneg %p323
        %p729 = pneg %p320
        %s730 = sand.u32 %s36, 1
        %s731 = scalar_lea.sflag [#allocation8], %s730
        %s732 = sand.u32 %s336, 1
        %s733 = smul.addr %s732, 128
        %s734 = scalar_lea.vmem [#allocation7], %s733
        %p735 = pneg %p349
        %p736 = pneg %p346
        %p737 = scmp.lt.s32.totalorder %s36, 1
        %s738 = scalar_select %p737, %s36, 1
        %s739 = scalar_lea.vmem %s13, %s738
        %p740 = pneg %p375
        %p741 = pneg %p372
        %p742 = scmp.lt.s32.totalorder %s36, 1
        %s743 = scalar_select %p742, %s36, 1
        %s744 = scalar_lea.vmem %s14, %s743
        %p745 = pneg %p401
        %p746 = pneg %p398
        %p747 = scmp.lt.s32.totalorder %s36, 1
        %s748 = scalar_select %p747, %s36, 1
        %s749 = scalar_lea.vmem %s15, %s748
        %p750 = pneg %p427
        %p751 = pneg %p424
        %p752 = pneg %p448
        %p753 = pneg %p445
        %p754 = pneg %p469
        %p755 = pneg %p466
        %p756 = pneg %p490
        %p757 = pneg %p487
        %p758 = scmp.lt.s32.totalorder %s36, 1
        %s759 = scalar_select %p758, %s36, 1
        %s760 = smul.addr %s759, 3
        %s761 = scalar_lea.vmem %s5, %s760
        %p762 = scmp.lt.s32.totalorder %s36, 1
        %s763 = scalar_select %p762, %s36, 1
        %s764 = smul.addr %s763, 16
        %s765 = smul.addr %s764, 4
        %s766 = scalar_lea.vmem %s6, %s765
        %p767 = scmp.lt.s32.totalorder %s36, 1
        %s768 = scalar_select %p767, %s36, 1
        %s769 = scalar_lea.vmem %s7, %s768
        %p770 = scmp.lt.s32.totalorder %s36, 1
        %s771 = scalar_select %p770, %s36, 1
        %s772 = scalar_lea.vmem %s8, %s771
        %p773 = scmp.lt.s32.totalorder %s36, 1
        %s774 = scalar_select %p773, %s36, 1
        %s775 = scalar_lea.vmem %s9, %s774
        %p776 = scmp.lt.s32.totalorder %s36, 1
        %s777 = scalar_select %p776, %s36, 1
        %s778 = smul.addr %s777, 32
        %s779 = smul.addr %s778, 4
        %s780 = scalar_lea.vmem %s10, %s779
        %p781 = scmp.lt.s32.totalorder %s36, 1
        %s782 = scalar_select %p781, %s36, 1
        %s783 = smul.addr %s782, 2
        %s784 = scalar_lea.vmem %s11, %s783
        %p785 = scmp.lt.s32.totalorder %s36, 1
        %s786 = scalar_select %p785, %s36, 1
        %s787 = scalar_lea.vmem %s13, %s786
        %p788 = scmp.lt.s32.totalorder %s36, 1
        %s789 = scalar_select %p788, %s36, 1
        %s790 = scalar_lea.vmem %s14, %s789
        %p791 = scmp.lt.s32.totalorder %s36, 1
        %s792 = scalar_select %p791, %s36, 1
        %s793 = scalar_lea.vmem %s15, %s792
        %p795 = scmp.eq.s32.totalorder %s36, 0
        // Predicated region
        $region105: #{_lambda_.1} parent=91 // pred_check
          %p796 = pneg %p795
        $region106: #{_lambda_.1} parent=91 // pred_check_branch
          %798 = sbr.rel (%p796) target = $region108
        $region107: #{_lambda_.1} parent=91 // pred_region
          %v799 = vld [vmem:[%s0] sm:$0xff]
          %v800 = vld [vmem:[%s0 + $0x8] sm:$0xff]
          %v801 = vld [vmem:[%s2] sm:$0x1]
          %v802 = vld [vmem:[%s3] sm:$0x1]
          %803 = vadd.xlane.f32.xlu0 %v799
          %v804 = vpop.xlane.xlu0 %803
          %805 = vadd.xlane.f32.xlu0 %v800
          %v806 = vpop.xlane.xlu0 %805
          %v807 = vrcp.pop 128.0
          %v808 = vmul.f32 %v804, %v807
          %v809 = vmul.f32 %v806, %v807
          %v810 = vsub.f32 %v799, %v808
          %v811 = vsub.f32 %v800, %v809
          %v812 = vmul.f32 %v810, %v810
          %v813 = vmul.f32 %v811, %v811
          %814 = vadd.xlane.f32.xlu0 %v812
          %v815 = vpop.xlane.xlu0 %814
          %816 = vadd.xlane.f32.xlu0 %v813
          %v817 = vpop.xlane.xlu0 %816
          %v818 = vmul.f32 %v815, %v807
          %v819 = vmul.f32 %v817, %v807
          %v820 = vadd.f32 %v818, 1e-12
          %v821 = vadd.f32 %v819, 1e-12
          %v822 = vrsqrt.pop %v820
          %v823 = vrsqrt.pop %v821
          %v824 = vmul.f32 %v810, %v822
          %v825 = vmul.f32 %v811, %v823
          %v827 = vlaneseq
          %v828 = vshrl.u32 %v827, 7
          %v829 = vsub.s32 0, %v828
          %v830 = vrot.slane %v801, %v829
          %v832 = vmul.f32 %v824, %v830
          %v833 = vmul.f32 %v825, %v830
          %v835 = vlaneseq
          %v836 = vshrl.u32 %v835, 7
          %v837 = vsub.s32 0, %v836
          %v838 = vrot.slane %v802, %v837
          %v840 = vadd.f32 %v832, %v838
          %v841 = vadd.f32 %v833, %v838
          %842 = vst [vmem:[#allocation2] sm:$0xff] %v840
          %843 = vst [vmem:[#allocation2 + $0x8] sm:$0xff] %v841
        $region108: #{_lambda_.1} parent=91 // pred_fallthru
          _
        %v844 = vld [vmem:[#allocation2] sm:$0xff]
        %v845 = vld [vmem:[#allocation2 + $0x8] sm:$0xff]
        %v846 = vpack.c.bf16 %v845, %v844
        %v847 = vld [vmem:[%s656] sm:$0xff]
        %v848 = vld [vmem:[%s656 + $0x8] sm:$0xf]
        %v849 = vld [vmem:[%s656 + $0xc] sm:$0xff]
        %v850 = vld [vmem:[%s656 + $0x14] sm:$0xf]
        %v851 = vld [vmem:[%s656 + $0x18] sm:$0xff]
        %v852 = vld [vmem:[%s656 + $0x20] sm:$0xf]
        %v853 = vld [vmem:[%s656 + $0x24] sm:$0xff]
        %v854 = vld [vmem:[%s656 + $0x2c] sm:$0xf]
        %v855 = vld [vmem:[%s656 + $0x30] sm:$0xff]
        %v856 = vld [vmem:[%s656 + $0x38] sm:$0xf]
        %v857 = vld [vmem:[%s656 + $0x3c] sm:$0xff]
        %v858 = vld [vmem:[%s656 + $0x44] sm:$0xf]
        %v859 = vld [vmem:[%s656 + $0x48] sm:$0xff]
        %v860 = vld [vmem:[%s656 + $0x50] sm:$0xf]
        %v861 = vld [vmem:[%s656 + $0x54] sm:$0xff]
        %v862 = vld [vmem:[%s656 + $0x5c] sm:$0xf]
        %v863 = vld [vmem:[%s656 + $0x60] sm:$0xff]
        %v864 = vld [vmem:[%s656 + $0x68] sm:$0xf]
        %v865 = vld [vmem:[%s656 + $0x6c] sm:$0xff]
        %v866 = vld [vmem:[%s656 + $0x74] sm:$0xf]
        %v867 = vld [vmem:[%s656 + $0x78] sm:$0xff]
        %v868 = vld [vmem:[%s656 + $0x80] sm:$0xf]
        %v869 = vld [vmem:[%s656 + $0x84] sm:$0xff]
        %v870 = vld [vmem:[%s656 + $0x8c] sm:$0xf]
        %v871 = vld [vmem:[%s656 + $0x90] sm:$0xff]
        %v872 = vld [vmem:[%s656 + $0x98] sm:$0xf]
        %v873 = vld [vmem:[%s656 + $0x9c] sm:$0xff]
        %v874 = vld [vmem:[%s656 + $0xa4] sm:$0xf]
        %v875 = vld [vmem:[%s656 + $0xa8] sm:$0xff]
        %v876 = vld [vmem:[%s656 + $0xb0] sm:$0xf]
        %v877 = vld [vmem:[%s656 + $0xb4] sm:$0xff]
        %v878 = vld [vmem:[%s656 + $0xbc] sm:$0xf]
        %v879 = vld [vmem:[%s761] sm:$0x7]
        %v881 = vlaneseq
        %v882 = vshrl.u32 %v881, 7
        %v883 = vsub.s32 0, %v882
        %v884 = vrot.slane %v879, %v883
        %v885 = vlaneseq
        %v886 = vshrl.u32 %v885, 7
        %v887 = vsub.s32 1, %v886
        %v888 = vrot.slane %v879, %v887
        %v889 = vlaneseq
        %v890 = vshrl.u32 %v889, 7
        %v891 = vsub.s32 2, %v890
        %v892 = vrot.slane %v879, %v891
        %v928 = vunpack.c.l.b16 %v847
        %v929 = vunpack.c.h.b16 %v847
        %v930 = vunpack.c.l.b16 %v848
        %v931 = vunpack.c.l.b16 %v849
        %v932 = vunpack.c.h.b16 %v849
        %v933 = vunpack.c.l.b16 %v850
        %v934 = vunpack.c.l.b16 %v851
        %v935 = vunpack.c.h.b16 %v851
        %v936 = vunpack.c.l.b16 %v852
        %v937 = vunpack.c.l.b16 %v853
        %v938 = vunpack.c.h.b16 %v853
        %v939 = vunpack.c.l.b16 %v854
        %v940 = vunpack.c.l.b16 %v855
        %v941 = vunpack.c.h.b16 %v855
        %v942 = vunpack.c.l.b16 %v856
        %v943 = vunpack.c.l.b16 %v857
        %v944 = vunpack.c.h.b16 %v857
        %v945 = vunpack.c.l.b16 %v858
        %v946 = vunpack.c.l.b16 %v859
        %v947 = vunpack.c.h.b16 %v859
        %v948 = vunpack.c.l.b16 %v860
        %v949 = vunpack.c.l.b16 %v861
        %v950 = vunpack.c.h.b16 %v861
        %v951 = vunpack.c.l.b16 %v862
        %v952 = vunpack.c.l.b16 %v863
        %v953 = vunpack.c.h.b16 %v863
        %v954 = vunpack.c.l.b16 %v864
        %v955 = vunpack.c.l.b16 %v865
        %v956 = vunpack.c.h.b16 %v865
        %v957 = vunpack.c.l.b16 %v866
        %v958 = vunpack.c.l.b16 %v867
        %v959 = vunpack.c.h.b16 %v867
        %v960 = vunpack.c.l.b16 %v868
        %v961 = vunpack.c.l.b16 %v869
        %v962 = vunpack.c.h.b16 %v869
        %v963 = vunpack.c.l.b16 %v870
        %v964 = vunpack.c.l.b16 %v871
        %v965 = vunpack.c.h.b16 %v871
        %v966 = vunpack.c.l.b16 %v872
        %v967 = vunpack.c.l.b16 %v873
        %v968 = vunpack.c.h.b16 %v873
        %v969 = vunpack.c.l.b16 %v874
        %v970 = vunpack.c.l.b16 %v875
        %v971 = vunpack.c.h.b16 %v875
        %v972 = vunpack.c.l.b16 %v876
        %v973 = vunpack.c.l.b16 %v877
        %v974 = vunpack.c.h.b16 %v877
        %v975 = vunpack.c.l.b16 %v878
        %v976 = vpack.c.b16 %v931, %v928
        %v977 = vpack.c.b16 %v932, %v929
        %v978 = vpack.c.b16 %v933, %v930
        %v979 = vpack.c.b16 %v937, %v934
        %v980 = vpack.c.b16 %v938, %v935
        %v981 = vpack.c.b16 %v939, %v936
        %v982 = vpack.c.b16 %v943, %v940
        %v983 = vpack.c.b16 %v944, %v941
        %v984 = vpack.c.b16 %v945, %v942
        %v985 = vpack.c.b16 %v949, %v946
        %v986 = vpack.c.b16 %v950, %v947
        %v987 = vpack.c.b16 %v951, %v948
        %v988 = vpack.c.b16 %v955, %v952
        %v989 = vpack.c.b16 %v956, %v953
        %v990 = vpack.c.b16 %v957, %v954
        %v991 = vpack.c.b16 %v961, %v958
        %v992 = vpack.c.b16 %v962, %v959
        %v993 = vpack.c.b16 %v963, %v960
        %v994 = vpack.c.b16 %v967, %v964
        %v995 = vpack.c.b16 %v968, %v965
        %v996 = vpack.c.b16 %v969, %v966
        %v997 = vpack.c.b16 %v973, %v970
        %v998 = vpack.c.b16 %v974, %v971
        %v999 = vpack.c.b16 %v975, %v972
        %1024 = vmatprep.subr.bf16.mxu0 %v977
        %1025 = vmatpush1.bf16.msra.mxu0 %v976
        %1026 = vmatprep.subr.bf16.mxu0 %v980
        %1027 = vmatpush1.bf16.msra.mxu0 %v979
        %1028 = vmatprep.subr.bf16.mxu0 %v983
        %1029 = vmatpush1.bf16.msra.mxu0 %v982
        %1030 = vmatprep.subr.bf16.mxu0 %v986
        %1031 = vmatpush1.bf16.msra.mxu0 %v985
        %1032 = vmatprep.subr.bf16.mxu0 %v989
        %1033 = vmatpush1.bf16.msra.mxu0 %v988
        %1034 = vmatprep.subr.bf16.mxu0 %v992
        %1035 = vmatpush1.bf16.msra.mxu0 %v991
        %1036 = vmatprep.subr.bf16.mxu0 %v995
        %1037 = vmatpush1.bf16.msra.mxu0 %v994
        %1038 = vmatprep.subr.bf16.mxu0 %v998
        %1039 = vmatpush1.bf16.msra.mxu0 %v997
        %1040 = vmatprep.subr.bf16.mxu0 0
        %1041 = vmatpush1.bf16.msra.mxu0 0
        %1042 = vmatprep.subr.bf16.mxu0 0
        %1043 = vmatpush1.bf16.msra.mxu0 0
        %1044 = vmatprep.subr.bf16.mxu0 0
        %1045 = vmatpush1.bf16.msra.mxu0 0
        %1046 = vmatprep.subr.bf16.mxu0 0
        %1047 = vmatpush1.bf16.msra.mxu0 0
        %1048 = vmatprep.subr.bf16.mxu0 0
        %1049 = vmatpush1.bf16.msra.mxu0 0
        %1050 = vmatprep.subr.bf16.mxu0 0
        %1051 = vmatpush1.bf16.msra.mxu0 0
        %1052 = vmatprep.subr.bf16.mxu0 0
        %1053 = vmatpush1.bf16.msra.mxu0 0
        %1054 = vmatprep.subr.bf16.mxu0 0
        %1055 = vmatpush1.bf16.msra.mxu0 0
        %1056 = vmatprep.mubr.bf16.mxu0 0
        %1057 = vmatmul.mubr.bf16.gmra.mrb[0].mxu0 %v846
        %v1058 = vpop.f32.mrb[0].mxu0
        %v1059 = vadd.f32 %v884, %v1058
        %v1060 = vpop.f32.mrb[0].mxu0
        %v1061 = vadd.f32 %v888, %v1060
        %v1062 = vpop.f32.mrb[0].mxu0
        %v1063 = vadd.f32 %v884, %v1062
        %v1064 = vpop.f32.mrb[0].mxu0
        %v1065 = vadd.f32 %v888, %v1064
        %1066 = vdwg.mxu0
        %1067 = vmatprep.subr.bf16.mxu0 0
        %1068 = vmatpush1.bf16.msra.mxu0 %v978
        %1069 = vmatprep.subr.bf16.mxu0 0
        %1070 = vmatpush1.bf16.msra.mxu0 %v981
        %1071 = vmatprep.subr.bf16.mxu0 0
        %1072 = vmatpush1.bf16.msra.mxu0 %v984
        %1073 = vmatprep.subr.bf16.mxu0 0
        %1074 = vmatpush1.bf16.msra.mxu0 %v987
        %1075 = vmatprep.subr.bf16.mxu0 0
        %1076 = vmatpush1.bf16.msra.mxu0 %v990
        %1077 = vmatprep.subr.bf16.mxu0 0
        %1078 = vmatpush1.bf16.msra.mxu0 %v993
        %1079 = vmatprep.subr.bf16.mxu0 0
        %1080 = vmatpush1.bf16.msra.mxu0 %v996
        %1081 = vmatprep.subr.bf16.mxu0 0
        %1082 = vmatpush1.bf16.msra.mxu0 %v999
        %1083 = vmatprep.subr.bf16.mxu0 0
        %1084 = vmatpush1.bf16.msra.mxu0 0
        %1085 = vmatprep.subr.bf16.mxu0 0
        %1086 = vmatpush1.bf16.msra.mxu0 0
        %1087 = vmatprep.subr.bf16.mxu0 0
        %1088 = vmatpush1.bf16.msra.mxu0 0
        %1089 = vmatprep.subr.bf16.mxu0 0
        %1090 = vmatpush1.bf16.msra.mxu0 0
        %1091 = vmatprep.subr.bf16.mxu0 0
        %1092 = vmatpush1.bf16.msra.mxu0 0
        %1093 = vmatprep.subr.bf16.mxu0 0
        %1094 = vmatpush1.bf16.msra.mxu0 0
        %1095 = vmatprep.subr.bf16.mxu0 0
        %1096 = vmatpush1.bf16.msra.mxu0 0
        %1097 = vmatprep.subr.bf16.mxu0 0
        %1098 = vmatpush1.bf16.msra.mxu0 0
        %1099 = vmatprep.mubr.bf16.mxu0 0
        %1100 = vmatmul.mubr.bf16.gmra.mrb[0].mxu0 %v846
        %v1101 = vpop.f32.mrb[0].mxu0
        %v1102 = vadd.f32 %v892, %v1101
        %v1103 = vpop.f32.mrb[0].mxu0
        %v1104 = vpop.f32.mrb[0].mxu0
        %v1105 = vadd.f32 %v892, %v1104
        %v1106 = vpop.f32.mrb[0].mxu0
        %1107 = vdwg.mxu0
        %v1108 = vld [vmem:[%s1] sm:$0xff]
        %v1109 = vld [vmem:[%s1 + $0x8] sm:$0xff]
        %v1110 = vpack.c.bf16 %v1063, %v1059
        %v1111 = vpack.c.bf16 %v1065, %v1061
        %v1112 = vpack.c.bf16 %v1105, %v1102
        %vm1113 = vcmask 523264
        %v1115 = vsel %vm1113, %v1110, 0
        %v1118 = vsel %vm1113, %v1111, 0
        %1120 = vmatprep.subr.bf16.mxu0 0
        %1121 = vmatpush1.bf16.xpose.msra.mxu0 %v1118
        %1122 = vmatprep.subr.bf16.mxu0 0
        %1123 = vmatpush1.bf16.xpose.msra.mxu0 0
        %1124 = vmatprep.subr.bf16.mxu0 0
        %1125 = vmatpush1.bf16.xpose.msra.mxu0 0
        %1126 = vmatprep.subr.bf16.mxu0 0
        %1127 = vmatpush1.bf16.xpose.msra.mxu0 0
        %1128 = vmatprep.subr.bf16.mxu0 0
        %1129 = vmatpush1.bf16.xpose.msra.mxu0 0
        %1130 = vmatprep.subr.bf16.mxu0 0
        %1131 = vmatpush1.bf16.xpose.msra.mxu0 0
        %1132 = vmatprep.subr.bf16.mxu0 0
        %1133 = vmatpush1.bf16.xpose.msra.mxu0 0
        %1134 = vmatprep.subr.bf16.mxu0 0
        %1135 = vmatpush1.bf16.xpose.msra.mxu0 0
        %1136 = vmatprep.subr.bf16.mxu0 0
        %1137 = vmatpush1.bf16.xpose.msra.mxu0 0
        %1138 = vmatprep.subr.bf16.mxu0 0
        %1139 = vmatpush1.bf16.xpose.msra.mxu0 0
        %1140 = vmatprep.subr.bf16.mxu0 0
        %1141 = vmatpush1.bf16.xpose.msra.mxu0 0
        %1142 = vmatprep.subr.bf16.mxu0 0
        %1143 = vmatpush1.bf16.xpose.msra.mxu0 0
        %1144 = vmatprep.subr.bf16.mxu0 0
        %1145 = vmatpush1.bf16.xpose.msra.mxu0 0
        %1146 = vmatprep.subr.bf16.mxu0 0
        %1147 = vmatpush1.bf16.xpose.msra.mxu0 0
        %1148 = vmatprep.subr.bf16.mxu0 0
        %1149 = vmatpush1.bf16.xpose.msra.mxu0 0
        %1150 = vmatprep.subr.bf16.mxu0 0
        %1151 = vmatpush1.bf16.xpose.msra.mxu0 0
        %1152 = vmatprep.mubr.bf16.mxu0 0
        %1153 = vmatmul.mubr.bf16.gmra.mrb[0].mxu0 %v1115
        %v1154 = vpop.f32.mrb[0].mxu0
        %v1155 = vadd.f32 0.0, %v1154
        %v1156 = vpop.f32.mrb[0].mxu0
        %v1157 = vpop.f32.mrb[0].mxu0
        %v1158 = vadd.f32 0.0, %v1157
        %v1159 = vpop.f32.mrb[0].mxu0
        %1160 = vdwg.mxu0
        %v1161 = vmul.f32 %v1155, 0.125
        %v1162 = vmul.f32 %v1158, 0.125
        %v1163 = vadd.f32 %v1161, %v1108
        %v1164 = vadd.f32 %v1162, %v1109
        %vm1165 = vcmask 130048
        %v1166 = vsel %vm1165, %v1163, -inf
        %1167 = vmax.xlane.f32.xlu0 %v1166
        %v1168 = vpop.xlane.xlu0 %1167
        %v1169 = vsel %vm1165, %v1164, -inf
        %1170 = vmax.xlane.f32.xlu0 %v1169
        %v1171 = vpop.xlane.xlu0 %1170
        %v1172 = vsub.f32 %v1163, %v1168
        %v1173 = vsub.f32 %v1164, %v1171
        %v1174 = vmul.f32 %v1172, 1.442695
        %v1175 = vpow.pop %v1174
        %v1176 = vmul.f32 %v1173, 1.442695
        %v1177 = vpow.pop %v1176
        %v1178 = vsel %vm1165, %v1175, 0.0
        %1179 = vadd.xlane.f32.xlu0 %v1178
        %v1180 = vpop.xlane.xlu0 %1179
        %v1181 = vsel %vm1165, %v1177, 0.0
        %1182 = vadd.xlane.f32.xlu0 %v1181
        %v1183 = vpop.xlane.xlu0 %1182
        %v1184 = vrcp.pop %v1180
        %v1185 = vrcp.pop %v1183
        %v1186 = vmul.f32 %v1175, %v1184
        %v1187 = vmul.f32 %v1177, %v1185
        %v1188 = vpack.c.bf16 %v1187, %v1186
        %v1190 = vsel %vm1165, %v1188, 0
        %1192 = vmatprep.subr.bf16.mxu0 0
        %1193 = vmatpush1.bf16.msra.mxu0 %v1112
        %1194 = vmatprep.subr.bf16.mxu0 0
        %1195 = vmatpush1.bf16.msra.mxu0 0
        %1196 = vmatprep.subr.bf16.mxu0 0
        %1197 = vmatpush1.bf16.msra.mxu0 0
        %1198 = vmatprep.subr.bf16.mxu0 0
        %1199 = vmatpush1.bf16.msra.mxu0 0
        %1200 = vmatprep.subr.bf16.mxu0 0
        %1201 = vmatpush1.bf16.msra.mxu0 0
        %1202 = vmatprep.subr.bf16.mxu0 0
        %1203 = vmatpush1.bf16.msra.mxu0 0
        %1204 = vmatprep.subr.bf16.mxu0 0
        %1205 = vmatpush1.bf16.msra.mxu0 0
        %1206 = vmatprep.subr.bf16.mxu0 0
        %1207 = vmatpush1.bf16.msra.mxu0 0
        %1208 = vmatprep.subr.bf16.mxu0 0
        %1209 = vmatpush1.bf16.msra.mxu0 0
        %1210 = vmatprep.subr.bf16.mxu0 0
        %1211 = vmatpush1.bf16.msra.mxu0 0
        %1212 = vmatprep.subr.bf16.mxu0 0
        %1213 = vmatpush1.bf16.msra.mxu0 0
        %1214 = vmatprep.subr.bf16.mxu0 0
        %1215 = vmatpush1.bf16.msra.mxu0 0
        %1216 = vmatprep.subr.bf16.mxu0 0
        %1217 = vmatpush1.bf16.msra.mxu0 0
        %1218 = vmatprep.subr.bf16.mxu0 0
        %1219 = vmatpush1.bf16.msra.mxu0 0
        %1220 = vmatprep.subr.bf16.mxu0 0
        %1221 = vmatpush1.bf16.msra.mxu0 0
        %1222 = vmatprep.subr.bf16.mxu0 0
        %1223 = vmatpush1.bf16.msra.mxu0 0
        %1224 = vmatprep.mubr.bf16.mxu0 0
        %1225 = vmatmul.mubr.bf16.gmra.mrb[0].mxu0 %v1190
        %v1226 = vpop.f32.mrb[0].mxu0
        %v1227 = vadd.f32 0.0, %v1226
        %v1228 = vpop.f32.mrb[0].mxu0
        %v1229 = vpop.f32.mrb[0].mxu0
        %v1230 = vadd.f32 0.0, %v1229
        %v1231 = vpop.f32.mrb[0].mxu0
        %1232 = vdwg.mxu0
        %1233 = vst.msk [vmem:[#allocation3] sm:$0xff] %vm1113, %v1227
        %1234 = vst.msk [vmem:[#allocation3 + $0x8] sm:$0xff] %vm1113, %v1230
        %1236 = vrot.lane.b32.xlu0 %v1110, 64
        %v1237 = vpop.permute.xlu0 %1236
        %1239 = vrot.lane.b32.xlu0 %v1111, 64
        %v1240 = vpop.permute.xlu0 %1239
        %v1242 = vsel %vm1113, %v1237, 0
        %v1245 = vsel %vm1113, %v1240, 0
        %1247 = vmatprep.subr.bf16.mxu0 0
        %1248 = vmatpush1.bf16.xpose.msra.mxu0 %v1245
        %1249 = vmatprep.subr.bf16.mxu0 0
        %1250 = vmatpush1.bf16.xpose.msra.mxu0 0
        %1251 = vmatprep.subr.bf16.mxu0 0
        %1252 = vmatpush1.bf16.xpose.msra.mxu0 0
        %1253 = vmatprep.subr.bf16.mxu0 0
        %1254 = vmatpush1.bf16.xpose.msra.mxu0 0
        %1255 = vmatprep.subr.bf16.mxu0 0
        %1256 = vmatpush1.bf16.xpose.msra.mxu0 0
        %1257 = vmatprep.subr.bf16.mxu0 0
        %1258 = vmatpush1.bf16.xpose.msra.mxu0 0
        %1259 = vmatprep.subr.bf16.mxu0 0
        %1260 = vmatpush1.bf16.xpose.msra.mxu0 0
        %1261 = vmatprep.subr.bf16.mxu0 0
        %1262 = vmatpush1.bf16.xpose.msra.mxu0 0
        %1263 = vmatprep.subr.bf16.mxu0 0
        %1264 = vmatpush1.bf16.xpose.msra.mxu0 0
        %1265 = vmatprep.subr.bf16.mxu0 0
        %1266 = vmatpush1.bf16.xpose.msra.mxu0 0
        %1267 = vmatprep.subr.bf16.mxu0 0
        %1268 = vmatpush1.bf16.xpose.msra.mxu0 0
        %1269 = vmatprep.subr.bf16.mxu0 0
        %1270 = vmatpush1.bf16.xpose.msra.mxu0 0
        %1271 = vmatprep.subr.bf16.mxu0 0
        %1272 = vmatpush1.bf16.xpose.msra.mxu0 0
        %1273 = vmatprep.subr.bf16.mxu0 0
        %1274 = vmatpush1.bf16.xpose.msra.mxu0 0
        %1275 = vmatprep.subr.bf16.mxu0 0
        %1276 = vmatpush1.bf16.xpose.msra.mxu0 0
        %1277 = vmatprep.subr.bf16.mxu0 0
        %1278 = vmatpush1.bf16.xpose.msra.mxu0 0
        %1279 = vmatprep.mubr.bf16.mxu0 0
        %1280 = vmatmul.mubr.bf16.gmra.mrb[0].mxu0 %v1242
        %v1281 = vpop.f32.mrb[0].mxu0
        %v1282 = vadd.f32 0.0, %v1281
        %v1283 = vpop.f32.mrb[0].mxu0
        %v1284 = vpop.f32.mrb[0].mxu0
        %v1285 = vadd.f32 0.0, %v1284
        %v1286 = vpop.f32.mrb[0].mxu0
        %1287 = vdwg.mxu0
        %v1288 = vmul.f32 %v1282, 0.125
        %v1289 = vmul.f32 %v1285, 0.125
        %v1290 = vadd.f32 %v1288, %v1108
        %v1291 = vadd.f32 %v1289, %v1109
        %v1292 = vsel %vm1165, %v1290, -inf
        %1293 = vmax.xlane.f32.xlu0 %v1292
        %v1294 = vpop.xlane.xlu0 %1293
        %v1295 = vsel %vm1165, %v1291, -inf
        %1296 = vmax.xlane.f32.xlu0 %v1295
        %v1297 = vpop.xlane.xlu0 %1296
        %v1298 = vsub.f32 %v1290, %v1294
        %v1299 = vsub.f32 %v1291, %v1297
        %v1300 = vmul.f32 %v1298, 1.442695
        %v1301 = vpow.pop %v1300
        %v1302 = vmul.f32 %v1299, 1.442695
        %v1303 = vpow.pop %v1302
        %v1304 = vsel %vm1165, %v1301, 0.0
        %1305 = vadd.xlane.f32.xlu0 %v1304
        %v1306 = vpop.xlane.xlu0 %1305
        %v1307 = vsel %vm1165, %v1303, 0.0
        %1308 = vadd.xlane.f32.xlu0 %v1307
        %v1309 = vpop.xlane.xlu0 %1308
        %v1310 = vrcp.pop %v1306
        %v1311 = vrcp.pop %v1309
        %v1312 = vmul.f32 %v1301, %v1310
        %v1313 = vmul.f32 %v1303, %v1311
        %v1314 = vpack.c.bf16 %v1313, %v1312
        %1316 = vrot.lane.b32.xlu0 %v1112, 64
        %v1317 = vpop.permute.xlu0 %1316
        %v1320 = vsel %vm1165, %v1314, 0
        %1322 = vmatprep.subr.bf16.mxu0 0
        %1323 = vmatpush1.bf16.msra.mxu0 %v1317
        %1324 = vmatprep.subr.bf16.mxu0 0
        %1325 = vmatpush1.bf16.msra.mxu0 0
        %1326 = vmatprep.subr.bf16.mxu0 0
        %1327 = vmatpush1.bf16.msra.mxu0 0
        %1328 = vmatprep.subr.bf16.mxu0 0
        %1329 = vmatpush1.bf16.msra.mxu0 0
        %1330 = vmatprep.subr.bf16.mxu0 0
        %1331 = vmatpush1.bf16.msra.mxu0 0
        %1332 = vmatprep.subr.bf16.mxu0 0
        %1333 = vmatpush1.bf16.msra.mxu0 0
        %1334 = vmatprep.subr.bf16.mxu0 0
        %1335 = vmatpush1.bf16.msra.mxu0 0
        %1336 = vmatprep.subr.bf16.mxu0 0
        %1337 = vmatpush1.bf16.msra.mxu0 0
        %1338 = vmatprep.subr.bf16.mxu0 0
        %1339 = vmatpush1.bf16.msra.mxu0 0
        %1340 = vmatprep.subr.bf16.mxu0 0
        %1341 = vmatpush1.bf16.msra.mxu0 0
        %1342 = vmatprep.subr.bf16.mxu0 0
        %1343 = vmatpush1.bf16.msra.mxu0 0
        %1344 = vmatprep.subr.bf16.mxu0 0
        %1345 = vmatpush1.bf16.msra.mxu0 0
        %1346 = vmatprep.subr.bf16.mxu0 0
        %1347 = vmatpush1.bf16.msra.mxu0 0
        %1348 = vmatprep.subr.bf16.mxu0 0
        %1349 = vmatpush1.bf16.msra.mxu0 0
        %1350 = vmatprep.subr.bf16.mxu0 0
        %1351 = vmatpush1.bf16.msra.mxu0 0
        %1352 = vmatprep.subr.bf16.mxu0 0
        %1353 = vmatpush1.bf16.msra.mxu0 0
        %1354 = vmatprep.mubr.bf16.mxu0 0
        %1355 = vmatmul.mubr.bf16.gmra.mrb[0].mxu0 %v1320
        %v1356 = vpop.f32.mrb[0].mxu0
        %v1357 = vadd.f32 0.0, %v1356
        %v1358 = vpop.f32.mrb[0].mxu0
        %v1359 = vpop.f32.mrb[0].mxu0
        %v1360 = vadd.f32 0.0, %v1359
        %v1361 = vpop.f32.mrb[0].mxu0
        %1362 = vdwg.mxu0
        %1365 = vrot.lane.b32.xlu0 %v1357, 64
        %v1366 = vpop.permute.xlu0 %1365
        %1367 = vrot.lane.b32.xlu0 %v1360, 64
        %v1368 = vpop.permute.xlu0 %1367
        %vm1371 = vcmask 1048064
        %1372 = vst.msk [vmem:[#allocation3] sm:$0xff] %vm1371, %v1366
        %1373 = vst.msk [vmem:[#allocation3 + $0x8] sm:$0xff] %vm1371, %v1368
        %v1374 = vld [vmem:[#allocation3] sm:$0xff]
        %v1375 = vld [vmem:[#allocation3 + $0x8] sm:$0xff]
        %v1376 = vpack.c.bf16 %v1375, %v1374
        %v1377 = vld [vmem:[%s766] sm:$0xf]
        %v1378 = vld [vmem:[%s766 + $0x4] sm:$0xf]
        %v1379 = vld [vmem:[%s766 + $0x8] sm:$0xf]
        %v1380 = vld [vmem:[%s766 + $0xc] sm:$0xf]
        %v1381 = vld [vmem:[%s766 + $0x10] sm:$0xf]
        %v1382 = vld [vmem:[%s766 + $0x14] sm:$0xf]
        %v1383 = vld [vmem:[%s766 + $0x18] sm:$0xf]
        %v1384 = vld [vmem:[%s766 + $0x1c] sm:$0xf]
        %v1385 = vld [vmem:[%s766 + $0x20] sm:$0xf]
        %v1386 = vld [vmem:[%s766 + $0x24] sm:$0xf]
        %v1387 = vld [vmem:[%s766 + $0x28] sm:$0xf]
        %v1388 = vld [vmem:[%s766 + $0x2c] sm:$0xf]
        %v1389 = vld [vmem:[%s766 + $0x30] sm:$0xf]
        %v1390 = vld [vmem:[%s766 + $0x34] sm:$0xf]
        %v1391 = vld [vmem:[%s766 + $0x38] sm:$0xf]
        %v1392 = vld [vmem:[%s766 + $0x3c] sm:$0xf]
        %v1393 = vld [vmem:[%s769] sm:$0x1]
        %v1395 = vlaneseq
        %v1396 = vshrl.u32 %v1395, 7
        %v1397 = vsub.s32 0, %v1396
        %v1398 = vrot.slane %v1393, %v1397
        %v1416 = vunpack.c.l.b16 %v1377
        %v1417 = vunpack.c.l.b16 %v1378
        %v1418 = vunpack.c.l.b16 %v1379
        %v1419 = vunpack.c.l.b16 %v1380
        %v1420 = vunpack.c.l.b16 %v1381
        %v1421 = vunpack.c.l.b16 %v1382
        %v1422 = vunpack.c.l.b16 %v1383
        %v1423 = vunpack.c.l.b16 %v1384
        %v1424 = vunpack.c.l.b16 %v1385
        %v1425 = vunpack.c.l.b16 %v1386
        %v1426 = vunpack.c.l.b16 %v1387
        %v1427 = vunpack.c.l.b16 %v1388
        %v1428 = vunpack.c.l.b16 %v1389
        %v1429 = vunpack.c.l.b16 %v1390
        %v1430 = vunpack.c.l.b16 %v1391
        %v1431 = vunpack.c.l.b16 %v1392
        %v1432 = vpack.c.b16 %v1417, %v1416
        %v1433 = vpack.c.b16 %v1419, %v1418
        %v1434 = vpack.c.b16 %v1421, %v1420
        %v1435 = vpack.c.b16 %v1423, %v1422
        %v1436 = vpack.c.b16 %v1425, %v1424
        %v1437 = vpack.c.b16 %v1427, %v1426
        %v1438 = vpack.c.b16 %v1429, %v1428
        %v1439 = vpack.c.b16 %v1431, %v1430
        %1448 = vmatprep.subr.bf16.mxu0 0
        %1449 = vmatpush1.bf16.msra.mxu0 %v1432
        %1450 = vmatprep.subr.bf16.mxu0 0
        %1451 = vmatpush1.bf16.msra.mxu0 %v1433
        %1452 = vmatprep.subr.bf16.mxu0 0
        %1453 = vmatpush1.bf16.msra.mxu0 %v1434
        %1454 = vmatprep.subr.bf16.mxu0 0
        %1455 = vmatpush1.bf16.msra.mxu0 %v1435
        %1456 = vmatprep.subr.bf16.mxu0 0
        %1457 = vmatpush1.bf16.msra.mxu0 %v1436
        %1458 = vmatprep.subr.bf16.mxu0 0
        %1459 = vmatpush1.bf16.msra.mxu0 %v1437
        %1460 = vmatprep.subr.bf16.mxu0 0
        %1461 = vmatpush1.bf16.msra.mxu0 %v1438
        %1462 = vmatprep.subr.bf16.mxu0 0
        %1463 = vmatpush1.bf16.msra.mxu0 %v1439
        %1464 = vmatprep.subr.bf16.mxu0 0
        %1465 = vmatpush1.bf16.msra.mxu0 0
        %1466 = vmatprep.subr.bf16.mxu0 0
        %1467 = vmatpush1.bf16.msra.mxu0 0
        %1468 = vmatprep.subr.bf16.mxu0 0
        %1469 = vmatpush1.bf16.msra.mxu0 0
        %1470 = vmatprep.subr.bf16.mxu0 0
        %1471 = vmatpush1.bf16.msra.mxu0 0
        %1472 = vmatprep.subr.bf16.mxu0 0
        %1473 = vmatpush1.bf16.msra.mxu0 0
        %1474 = vmatprep.subr.bf16.mxu0 0
        %1475 = vmatpush1.bf16.msra.mxu0 0
        %1476 = vmatprep.subr.bf16.mxu0 0
        %1477 = vmatpush1.bf16.msra.mxu0 0
        %1478 = vmatprep.subr.bf16.mxu0 0
        %1479 = vmatpush1.bf16.msra.mxu0 0
        %1480 = vmatprep.mubr.bf16.mxu0 0
        %1481 = vmatmul.mubr.bf16.gmra.mrb[0].mxu0 %v1376
        %v1482 = vpop.f32.mrb[0].mxu0
        %v1483 = vadd.f32 %v1398, %v1482
        %v1484 = vpop.f32.mrb[0].mxu0
        %v1485 = vpop.f32.mrb[0].mxu0
        %v1486 = vadd.f32 %v1398, %v1485
        %v1487 = vpop.f32.mrb[0].mxu0
        %1488 = vdwg.mxu0
        %v1489 = vadd.f32 %v1483, %v844
        %v1490 = vadd.f32 %v1486, %v845
        %v1491 = vld [vmem:[%s772] sm:$0x1]
        %v1492 = vld [vmem:[%s775] sm:$0x1]
        %1493 = vadd.xlane.f32.xlu0 %v1489
        %v1494 = vpop.xlane.xlu0 %1493
        %1495 = vadd.xlane.f32.xlu0 %v1490
        %v1496 = vpop.xlane.xlu0 %1495
        %v1497 = vrcp.pop 128.0
        %v1498 = vmul.f32 %v1494, %v1497
        %v1499 = vmul.f32 %v1496, %v1497
        %v1500 = vsub.f32 %v1489, %v1498
        %v1501 = vsub.f32 %v1490, %v1499
        %v1502 = vmul.f32 %v1500, %v1500
        %v1503 = vmul.f32 %v1501, %v1501
        %1504 = vadd.xlane.f32.xlu0 %v1502
        %v1505 = vpop.xlane.xlu0 %1504
        %1506 = vadd.xlane.f32.xlu0 %v1503
        %v1507 = vpop.xlane.xlu0 %1506
        %v1508 = vmul.f32 %v1505, %v1497
        %v1509 = vmul.f32 %v1507, %v1497
        %v1510 = vadd.f32 %v1508, 1e-12
        %v1511 = vadd.f32 %v1509, 1e-12
        %v1512 = vrsqrt.pop %v1510
        %v1513 = vrsqrt.pop %v1511
        %v1514 = vmul.f32 %v1500, %v1512
        %v1515 = vmul.f32 %v1501, %v1513
        %v1517 = vlaneseq
        %v1518 = vshrl.u32 %v1517, 7
        %v1519 = vsub.s32 0, %v1518
        %v1520 = vrot.slane %v1491, %v1519
        %v1522 = vmul.f32 %v1514, %v1520
        %v1523 = vmul.f32 %v1515, %v1520
        %v1525 = vlaneseq
        %v1526 = vshrl.u32 %v1525, 7
        %v1527 = vsub.s32 0, %v1526
        %v1528 = vrot.slane %v1492, %v1527
        %v1530 = vadd.f32 %v1522, %v1528
        %v1531 = vadd.f32 %v1523, %v1528
        %v1532 = vpack.c.bf16 %v1531, %v1530
        %v1533 = vld [vmem:[%s780] sm:$0xff]
        %v1534 = vld [vmem:[%s780 + $0x8] sm:$0xff]
        %v1535 = vld [vmem:[%s780 + $0x10] sm:$0xff]
        %v1536 = vld [vmem:[%s780 + $0x18] sm:$0xff]
        %v1537 = vld [vmem:[%s780 + $0x20] sm:$0xff]
        %v1538 = vld [vmem:[%s780 + $0x28] sm:$0xff]
        %v1539 = vld [vmem:[%s780 + $0x30] sm:$0xff]
        %v1540 = vld [vmem:[%s780 + $0x38] sm:$0xff]
        %v1541 = vld [vmem:[%s780 + $0x40] sm:$0xff]
        %v1542 = vld [vmem:[%s780 + $0x48] sm:$0xff]
        %v1543 = vld [vmem:[%s780 + $0x50] sm:$0xff]
        %v1544 = vld [vmem:[%s780 + $0x58] sm:$0xff]
        %v1545 = vld [vmem:[%s780 + $0x60] sm:$0xff]
        %v1546 = vld [vmem:[%s780 + $0x68] sm:$0xff]
        %v1547 = vld [vmem:[%s780 + $0x70] sm:$0xff]
        %v1548 = vld [vmem:[%s780 + $0x78] sm:$0xff]
        %v1549 = vld [vmem:[%s784] sm:$0x3]
        %v1551 = vlaneseq
        %v1552 = vshrl.u32 %v1551, 7
        %v1553 = vsub.s32 0, %v1552
        %v1554 = vrot.slane %v1549, %v1553
        %v1555 = vlaneseq
        %v1556 = vshrl.u32 %v1555, 7
        %v1557 = vsub.s32 1, %v1556
        %v1558 = vrot.slane %v1549, %v1557
        %v1577 = vunpack.c.l.b16 %v1533
        %v1578 = vunpack.c.h.b16 %v1533
        %v1579 = vunpack.c.l.b16 %v1534
        %v1580 = vunpack.c.h.b16 %v1534
        %v1581 = vunpack.c.l.b16 %v1535
        %v1582 = vunpack.c.h.b16 %v1535
        %v1583 = vunpack.c.l.b16 %v1536
        %v1584 = vunpack.c.h.b16 %v1536
        %v1585 = vunpack.c.l.b16 %v1537
        %v1586 = vunpack.c.h.b16 %v1537
        %v1587 = vunpack.c.l.b16 %v1538
        %v1588 = vunpack.c.h.b16 %v1538
        %v1589 = vunpack.c.l.b16 %v1539
        %v1590 = vunpack.c.h.b16 %v1539
        %v1591 = vunpack.c.l.b16 %v1540
        %v1592 = vunpack.c.h.b16 %v1540
        %v1593 = vunpack.c.l.b16 %v1541
        %v1594 = vunpack.c.h.b16 %v1541
        %v1595 = vunpack.c.l.b16 %v1542
        %v1596 = vunpack.c.h.b16 %v1542
        %v1597 = vunpack.c.l.b16 %v1543
        %v1598 = vunpack.c.h.b16 %v1543
        %v1599 = vunpack.c.l.b16 %v1544
        %v1600 = vunpack.c.h.b16 %v1544
        %v1601 = vunpack.c.l.b16 %v1545
        %v1602 = vunpack.c.h.b16 %v1545
        %v1603 = vunpack.c.l.b16 %v1546
        %v1604 = vunpack.c.h.b16 %v1546
        %v1605 = vunpack.c.l.b16 %v1547
        %v1606 = vunpack.c.h.b16 %v1547
        %v1607 = vunpack.c.l.b16 %v1548
        %v1608 = vunpack.c.h.b16 %v1548
        %v1609 = vpack.c.b16 %v1579, %v1577
        %v1610 = vpack.c.b16 %v1580, %v1578
        %v1611 = vpack.c.b16 %v1583, %v1581
        %v1612 = vpack.c.b16 %v1584, %v1582
        %v1613 = vpack.c.b16 %v1587, %v1585
        %v1614 = vpack.c.b16 %v1588, %v1586
        %v1615 = vpack.c.b16 %v1591, %v1589
        %v1616 = vpack.c.b16 %v1592, %v1590
        %v1617 = vpack.c.b16 %v1595, %v1593
        %v1618 = vpack.c.b16 %v1596, %v1594
        %v1619 = vpack.c.b16 %v1599, %v1597
        %v1620 = vpack.c.b16 %v1600, %v1598
        %v1621 = vpack.c.b16 %v1603, %v1601
        %v1622 = vpack.c.b16 %v1604, %v1602
        %v1623 = vpack.c.b16 %v1607, %v1605
        %v1624 = vpack.c.b16 %v1608, %v1606
        %1641 = vmatprep.subr.bf16.mxu0 %v1610
        %1642 = vmatpush1.bf16.msra.mxu0 %v1609
        %1643 = vmatprep.subr.bf16.mxu0 %v1612
        %1644 = vmatpush1.bf16.msra.mxu0 %v1611
        %1645 = vmatprep.subr.bf16.mxu0 %v1614
        %1646 = vmatpush1.bf16.msra.mxu0 %v1613
        %1647 = vmatprep.subr.bf16.mxu0 %v1616
        %1648 = vmatpush1.bf16.msra.mxu0 %v1615
        %1649 = vmatprep.subr.bf16.mxu0 %v1618
        %1650 = vmatpush1.bf16.msra.mxu0 %v1617
        %1651 = vmatprep.subr.bf16.mxu0 %v1620
        %1652 = vmatpush1.bf16.msra.mxu0 %v1619
        %1653 = vmatprep.subr.bf16.mxu0 %v1622
        %1654 = vmatpush1.bf16.msra.mxu0 %v1621
        %1655 = vmatprep.subr.bf16.mxu0 %v1624
        %1656 = vmatpush1.bf16.msra.mxu0 %v1623
        %1657 = vmatprep.subr.bf16.mxu0 0
        %1658 = vmatpush1.bf16.msra.mxu0 0
        %1659 = vmatprep.subr.bf16.mxu0 0
        %1660 = vmatpush1.bf16.msra.mxu0 0
        %1661 = vmatprep.subr.bf16.mxu0 0
        %1662 = vmatpush1.bf16.msra.mxu0 0
        %1663 = vmatprep.subr.bf16.mxu0 0
        %1664 = vmatpush1.bf16.msra.mxu0 0
        %1665 = vmatprep.subr.bf16.mxu0 0
        %1666 = vmatpush1.bf16.msra.mxu0 0
        %1667 = vmatprep.subr.bf16.mxu0 0
        %1668 = vmatpush1.bf16.msra.mxu0 0
        %1669 = vmatprep.subr.bf16.mxu0 0
        %1670 = vmatpush1.bf16.msra.mxu0 0
        %1671 = vmatprep.subr.bf16.mxu0 0
        %1672 = vmatpush1.bf16.msra.mxu0 0
        %1673 = vmatprep.mubr.bf16.mxu0 0
        %1674 = vmatmul.mubr.bf16.gmra.mrb[0].mxu0 %v1532
        %v1675 = vpop.f32.mrb[0].mxu0
        %v1676 = vadd.f32 %v1554, %v1675
        %v1677 = vpop.f32.mrb[0].mxu0
        %v1678 = vadd.f32 %v1558, %v1677
        %v1679 = vpop.f32.mrb[0].mxu0
        %v1680 = vadd.f32 %v1554, %v1679
        %v1681 = vpop.f32.mrb[0].mxu0
        %v1682 = vadd.f32 %v1558, %v1681
        %1683 = vdwg.mxu0
        %v1684 = vmul.f32 %v1676, %v1676
        %v1685 = vmul.f32 %v1678, %v1678
        %v1686 = vmul.f32 %v1680, %v1680
        %v1687 = vmul.f32 %v1682, %v1682
        %v1688 = vmul.f32 %v1676, %v1684
        %v1689 = vmul.f32 %v1678, %v1685
        %v1690 = vmul.f32 %v1680, %v1686
        %v1691 = vmul.f32 %v1682, %v1687
        %v1692 = vmul.f32 %v1688, 0.044715
        %v1693 = vmul.f32 %v1689, 0.044715
        %v1694 = vmul.f32 %v1690, 0.044715
        %v1695 = vmul.f32 %v1691, 0.044715
        %v1696 = vadd.f32 %v1676, %v1692
        %v1697 = vadd.f32 %v1678, %v1693
        %v1698 = vadd.f32 %v1680, %v1694
        %v1699 = vadd.f32 %v1682, %v1695
        %v1700 = vmul.f32 %v1696, 0.7978846
        %v1701 = vmul.f32 %v1697, 0.7978846
        %v1702 = vmul.f32 %v1698, 0.7978846
        %v1703 = vmul.f32 %v1699, 0.7978846
        %v1704 = vtanh.pop %v1700
        %v1705 = vtanh.pop %v1701
        %v1706 = vtanh.pop %v1702
        %v1707 = vtanh.pop %v1703
        %v1708 = vadd.f32 %v1704, 1.0
        %v1709 = vadd.f32 %v1705, 1.0
        %v1710 = vadd.f32 %v1706, 1.0
        %v1711 = vadd.f32 %v1707, 1.0
        %v1712 = vmul.f32 %v1708, 0.5
        %v1713 = vmul.f32 %v1709, 0.5
        %v1714 = vmul.f32 %v1710, 0.5
        %v1715 = vmul.f32 %v1711, 0.5
        %v1716 = vmul.f32 %v1676, %v1712
        %v1717 = vmul.f32 %v1678, %v1713
        %v1718 = vmul.f32 %v1680, %v1714
        %v1719 = vmul.f32 %v1682, %v1715
        %v1720 = vpack.c.bf16 %v1718, %v1716
        %v1721 = vpack.c.bf16 %v1719, %v1717
        %v1722 = vld [vmem:[%s665] sm:$0xf]
        %v1723 = vld [vmem:[%s665 + $0x4] sm:$0xf]
        %v1724 = vld [vmem:[%s665 + $0x8] sm:$0xf]
        %v1725 = vld [vmem:[%s665 + $0xc] sm:$0xf]
        %v1726 = vld [vmem:[%s665 + $0x10] sm:$0xf]
        %v1727 = vld [vmem:[%s665 + $0x14] sm:$0xf]
        %v1728 = vld [vmem:[%s665 + $0x18] sm:$0xf]
        %v1729 = vld [vmem:[%s665 + $0x1c] sm:$0xf]
        %v1730 = vld [vmem:[%s665 + $0x20] sm:$0xf]
        %v1731 = vld [vmem:[%s665 + $0x24] sm:$0xf]
        %v1732 = vld [vmem:[%s665 + $0x28] sm:$0xf]
        %v1733 = vld [vmem:[%s665 + $0x2c] sm:$0xf]
        %v1734 = vld [vmem:[%s665 + $0x30] sm:$0xf]
        %v1735 = vld [vmem:[%s665 + $0x34] sm:$0xf]
        %v1736 = vld [vmem:[%s665 + $0x38] sm:$0xf]
        %v1737 = vld [vmem:[%s665 + $0x3c] sm:$0xf]
        %v1738 = vld [vmem:[%s665 + $0x40] sm:$0xf]
        %v1739 = vld [vmem:[%s665 + $0x44] sm:$0xf]
        %v1740 = vld [vmem:[%s665 + $0x48] sm:$0xf]
        %v1741 = vld [vmem:[%s665 + $0x4c] sm:$0xf]
        %v1742 = vld [vmem:[%s665 + $0x50] sm:$0xf]
        %v1743 = vld [vmem:[%s665 + $0x54] sm:$0xf]
        %v1744 = vld [vmem:[%s665 + $0x58] sm:$0xf]
        %v1745 = vld [vmem:[%s665 + $0x5c] sm:$0xf]
        %v1746 = vld [vmem:[%s665 + $0x60] sm:$0xf]
        %v1747 = vld [vmem:[%s665 + $0x64] sm:$0xf]
        %v1748 = vld [vmem:[%s665 + $0x68] sm:$0xf]
        %v1749 = vld [vmem:[%s665 + $0x6c] sm:$0xf]
        %v1750 = vld [vmem:[%s665 + $0x70] sm:$0xf]
        %v1751 = vld [vmem:[%s665 + $0x74] sm:$0xf]
        %v1752 = vld [vmem:[%s665 + $0x78] sm:$0xf]
        %v1753 = vld [vmem:[%s665 + $0x7c] sm:$0xf]
        %v1754 = vld [vmem:[%s787] sm:$0x1]
        %v1756 = vlaneseq
        %v1757 = vshrl.u32 %v1756, 7
        %v1758 = vsub.s32 0, %v1757
        %v1759 = vrot.slane %v1754, %v1758
        %v1793 = vunpack.c.l.b16 %v1722
        %v1794 = vunpack.c.l.b16 %v1723
        %v1795 = vunpack.c.l.b16 %v1724
        %v1796 = vunpack.c.l.b16 %v1725
        %v1797 = vunpack.c.l.b16 %v1726
        %v1798 = vunpack.c.l.b16 %v1727
        %v1799 = vunpack.c.l.b16 %v1728
        %v1800 = vunpack.c.l.b16 %v1729
        %v1801 = vunpack.c.l.b16 %v1730
        %v1802 = vunpack.c.l.b16 %v1731
        %v1803 = vunpack.c.l.b16 %v1732
        %v1804 = vunpack.c.l.b16 %v1733
        %v1805 = vunpack.c.l.b16 %v1734
        %v1806 = vunpack.c.l.b16 %v1735
        %v1807 = vunpack.c.l.b16 %v1736
        %v1808 = vunpack.c.l.b16 %v1737
        %v1809 = vunpack.c.l.b16 %v1738
        %v1810 = vunpack.c.l.b16 %v1739
        %v1811 = vunpack.c.l.b16 %v1740
        %v1812 = vunpack.c.l.b16 %v1741
        %v1813 = vunpack.c.l.b16 %v1742
        %v1814 = vunpack.c.l.b16 %v1743
        %v1815 = vunpack.c.l.b16 %v1744
        %v1816 = vunpack.c.l.b16 %v1745
        %v1817 = vunpack.c.l.b16 %v1746
        %v1818 = vunpack.c.l.b16 %v1747
        %v1819 = vunpack.c.l.b16 %v1748
        %v1820 = vunpack.c.l.b16 %v1749
        %v1821 = vunpack.c.l.b16 %v1750
        %v1822 = vunpack.c.l.b16 %v1751
        %v1823 = vunpack.c.l.b16 %v1752
        %v1824 = vunpack.c.l.b16 %v1753
        %v1825 = vpack.c.b16 %v1794, %v1793
        %v1826 = vpack.c.b16 %v1796, %v1795
        %v1827 = vpack.c.b16 %v1798, %v1797
        %v1828 = vpack.c.b16 %v1800, %v1799
        %v1829 = vpack.c.b16 %v1802, %v1801
        %v1830 = vpack.c.b16 %v1804, %v1803
        %v1831 = vpack.c.b16 %v1806, %v1805
        %v1832 = vpack.c.b16 %v1808, %v1807
        %v1833 = vpack.c.b16 %v1810, %v1809
        %v1834 = vpack.c.b16 %v1812, %v1811
        %v1835 = vpack.c.b16 %v1814, %v1813
        %v1836 = vpack.c.b16 %v1816, %v1815
        %v1837 = vpack.c.b16 %v1818, %v1817
        %v1838 = vpack.c.b16 %v1820, %v1819
        %v1839 = vpack.c.b16 %v1822, %v1821
        %v1840 = vpack.c.b16 %v1824, %v1823
        %1857 = vmatprep.subr.bf16.mxu0 0
        %1858 = vmatpush1.bf16.msra.mxu0 %v1825
        %1859 = vmatprep.subr.bf16.mxu0 0
        %1860 = vmatpush1.bf16.msra.mxu0 %v1826
        %1861 = vmatprep.subr.bf16.mxu0 0
        %1862 = vmatpush1.bf16.msra.mxu0 %v1827
        %1863 = vmatprep.subr.bf16.mxu0 0
        %1864 = vmatpush1.bf16.msra.mxu0 %v1828
        %1865 = vmatprep.subr.bf16.mxu0 0
        %1866 = vmatpush1.bf16.msra.mxu0 %v1829
        %1867 = vmatprep.subr.bf16.mxu0 0
        %1868 = vmatpush1.bf16.msra.mxu0 %v1830
        %1869 = vmatprep.subr.bf16.mxu0 0
        %1870 = vmatpush1.bf16.msra.mxu0 %v1831
        %1871 = vmatprep.subr.bf16.mxu0 0
        %1872 = vmatpush1.bf16.msra.mxu0 %v1832
        %1873 = vmatprep.subr.bf16.mxu0 0
        %1874 = vmatpush1.bf16.msra.mxu0 %v1833
        %1875 = vmatprep.subr.bf16.mxu0 0
        %1876 = vmatpush1.bf16.msra.mxu0 %v1834
        %1877 = vmatprep.subr.bf16.mxu0 0
        %1878 = vmatpush1.bf16.msra.mxu0 %v1835
        %1879 = vmatprep.subr.bf16.mxu0 0
        %1880 = vmatpush1.bf16.msra.mxu0 %v1836
        %1881 = vmatprep.subr.bf16.mxu0 0
        %1882 = vmatpush1.bf16.msra.mxu0 %v1837
        %1883 = vmatprep.subr.bf16.mxu0 0
        %1884 = vmatpush1.bf16.msra.mxu0 %v1838
        %1885 = vmatprep.subr.bf16.mxu0 0
        %1886 = vmatpush1.bf16.msra.mxu0 %v1839
        %1887 = vmatprep.subr.bf16.mxu0 0
        %1888 = vmatpush1.bf16.msra.mxu0 %v1840
        %1889 = vmatprep.mubr.bf16.mxu0 %v1721
        %1890 = vmatmul.mubr.bf16.gmra.mrb[0].mxu0 %v1720
        %v1891 = vpop.f32.mrb[0].mxu0
        %v1892 = vadd.f32 %v1759, %v1891
        %v1893 = vpop.f32.mrb[0].mxu0
        %v1894 = vpop.f32.mrb[0].mxu0
        %v1895 = vadd.f32 %v1759, %v1894
        %v1896 = vpop.f32.mrb[0].mxu0
        %1897 = vdwg.mxu0
        %v1898 = vadd.f32 %v1892, %v1530
        %v1899 = vadd.f32 %v1895, %v1531
        %v1900 = vld [vmem:[%s790] sm:$0x1]
        %v1901 = vld [vmem:[%s793] sm:$0x1]
        %1902 = vadd.xlane.f32.xlu0 %v1898
        %v1903 = vpop.xlane.xlu0 %1902
        %1904 = vadd.xlane.f32.xlu0 %v1899
        %v1905 = vpop.xlane.xlu0 %1904
        %v1906 = vmul.f32 %v1903, %v1497
        %v1907 = vmul.f32 %v1905, %v1497
        %v1908 = vsub.f32 %v1898, %v1906
        %v1909 = vsub.f32 %v1899, %v1907
        %v1910 = vmul.f32 %v1908, %v1908
        %v1911 = vmul.f32 %v1909, %v1909
        %1912 = vadd.xlane.f32.xlu0 %v1910
        %v1913 = vpop.xlane.xlu0 %1912
        %1914 = vadd.xlane.f32.xlu0 %v1911
        %v1915 = vpop.xlane.xlu0 %1914
        %v1916 = vmul.f32 %v1913, %v1497
        %v1917 = vmul.f32 %v1915, %v1497
        %v1918 = vadd.f32 %v1916, 1e-12
        %v1919 = vadd.f32 %v1917, 1e-12
        %v1920 = vrsqrt.pop %v1918
        %v1921 = vrsqrt.pop %v1919
        %v1922 = vmul.f32 %v1908, %v1920
        %v1923 = vmul.f32 %v1909, %v1921
        %v1925 = vlaneseq
        %v1926 = vshrl.u32 %v1925, 7
        %v1927 = vsub.s32 0, %v1926
        %v1928 = vrot.slane %v1900, %v1927
        %v1930 = vmul.f32 %v1922, %v1928
        %v1931 = vmul.f32 %v1923, %v1928
        %v1933 = vlaneseq
        %v1934 = vshrl.u32 %v1933, 7
        %v1935 = vsub.s32 0, %v1934
        %v1936 = vrot.slane %v1901, %v1935
        %v1938 = vadd.f32 %v1930, %v1936
        %v1939 = vadd.f32 %v1931, %v1936
        %1940 = vst [vmem:[#allocation2] sm:$0xff] %v1938
        %1941 = vst [vmem:[#allocation2 + $0x8] sm:$0xff] %v1939
        %p1942 = scmp.eq.s32.totalorder %s36, 1
        // Predicated region
        $region109: #{_lambda_.1} parent=91 // pred_check
          %p1943 = pneg %p1942
        $region110: #{_lambda_.1} parent=91 // pred_check_branch
          %1945 = sbr.rel (%p1943) target = $region112
        $region111: #{_lambda_.1} parent=91 // pred_region
          %v1947 = vrot.slane %v1939, 7
          %vm1949 = vcmask 1040384
          %v1950 = vsel %vm1949, %v1938, %v1947
          %v1951 = vpack.c.bf16 %v1950, %v1950
          %v1952 = vld [vmem:[#allocation9] sm:$0xf]
          %v1953 = vld [vmem:[#allocation9 + $0x4] sm:$0xf]
          %v1954 = vld [vmem:[#allocation9 + $0x8] sm:$0xf]
          %v1955 = vld [vmem:[#allocation9 + $0xc] sm:$0xf]
          %v1956 = vld [vmem:[#allocation9 + $0x10] sm:$0xf]
          %v1957 = vld [vmem:[#allocation9 + $0x14] sm:$0xf]
          %v1958 = vld [vmem:[#allocation9 + $0x18] sm:$0xf]
          %v1959 = vld [vmem:[#allocation9 + $0x1c] sm:$0xf]
          %v1960 = vld [vmem:[#allocation9 + $0x20] sm:$0xf]
          %v1961 = vld [vmem:[#allocation9 + $0x24] sm:$0xf]
          %v1962 = vld [vmem:[#allocation9 + $0x28] sm:$0xf]
          %v1963 = vld [vmem:[#allocation9 + $0x2c] sm:$0xf]
          %v1964 = vld [vmem:[#allocation9 + $0x30] sm:$0xf]
          %v1965 = vld [vmem:[#allocation9 + $0x34] sm:$0xf]
          %v1966 = vld [vmem:[#allocation9 + $0x38] sm:$0xf]
          %v1967 = vld [vmem:[#allocation9 + $0x3c] sm:$0xf]
          %v1968 = vld [vmem:[%s17] sm:$0x1]
          %v1970 = vlaneseq
          %v1971 = vshrl.u32 %v1970, 7
          %v1972 = vsub.s32 0, %v1971
          %v1973 = vrot.slane %v1968, %v1972
          %v1991 = vunpack.c.l.b16 %v1952
          %v1992 = vunpack.c.l.b16 %v1953
          %v1993 = vunpack.c.l.b16 %v1954
          %v1994 = vunpack.c.l.b16 %v1955
          %v1995 = vunpack.c.l.b16 %v1956
          %v1996 = vunpack.c.l.b16 %v1957
          %v1997 = vunpack.c.l.b16 %v1958
          %v1998 = vunpack.c.l.b16 %v1959
          %v1999 = vunpack.c.l.b16 %v1960
          %v2000 = vunpack.c.l.b16 %v1961
          %v2001 = vunpack.c.l.b16 %v1962
          %v2002 = vunpack.c.l.b16 %v1963
          %v2003 = vunpack.c.l.b16 %v1964
          %v2004 = vunpack.c.l.b16 %v1965
          %v2005 = vunpack.c.l.b16 %v1966
          %v2006 = vunpack.c.l.b16 %v1967
          %v2007 = vpack.c.b16 %v1992, %v1991
          %v2008 = vpack.c.b16 %v1994, %v1993
          %v2009 = vpack.c.b16 %v1996, %v1995
          %v2010 = vpack.c.b16 %v1998, %v1997
          %v2011 = vpack.c.b16 %v2000, %v1999
          %v2012 = vpack.c.b16 %v2002, %v2001
          %v2013 = vpack.c.b16 %v2004, %v2003
          %v2014 = vpack.c.b16 %v2006, %v2005
          %2023 = vmatprep.subr.bf16.mxu0 0
          %2024 = vmatpush1.bf16.msra.mxu0 %v2007
          %2025 = vmatprep.subr.bf16.mxu0 0
          %2026 = vmatpush1.bf16.msra.mxu0 %v2008
          %2027 = vmatprep.subr.bf16.mxu0 0
          %2028 = vmatpush1.bf16.msra.mxu0 %v2009
          %2029 = vmatprep.subr.bf16.mxu0 0
          %2030 = vmatpush1.bf16.msra.mxu0 %v2010
          %2031 = vmatprep.subr.bf16.mxu0 0
          %2032 = vmatpush1.bf16.msra.mxu0 %v2011
          %2033 = vmatprep.subr.bf16.mxu0 0
          %2034 = vmatpush1.bf16.msra.mxu0 %v2012
          %2035 = vmatprep.subr.bf16.mxu0 0
          %2036 = vmatpush1.bf16.msra.mxu0 %v2013
          %2037 = vmatprep.subr.bf16.mxu0 0
          %2038 = vmatpush1.bf16.msra.mxu0 %v2014
          %2039 = vmatprep.subr.bf16.mxu0 0
          %2040 = vmatpush1.bf16.msra.mxu0 0
          %2041 = vmatprep.subr.bf16.mxu0 0
          %2042 = vmatpush1.bf16.msra.mxu0 0
          %2043 = vmatprep.subr.bf16.mxu0 0
          %2044 = vmatpush1.bf16.msra.mxu0 0
          %2045 = vmatprep.subr.bf16.mxu0 0
          %2046 = vmatpush1.bf16.msra.mxu0 0
          %2047 = vmatprep.subr.bf16.mxu0 0
          %2048 = vmatpush1.bf16.msra.mxu0 0
          %2049 = vmatprep.subr.bf16.mxu0 0
          %2050 = vmatpush1.bf16.msra.mxu0 0
          %2051 = vmatprep.subr.bf16.mxu0 0
          %2052 = vmatpush1.bf16.msra.mxu0 0
          %2053 = vmatprep.subr.bf16.mxu0 0
          %2054 = vmatpush1.bf16.msra.mxu0 0
          %2055 = vmatprep.mubr.bf16.mxu0 0
          %2056 = vmatmul.mubr.bf16.gmra.mrb[0].mxu0 %v1951
          %v2057 = vpop.f32.mrb[0].mxu0
          %v2058 = vadd.f32 %v1973, %v2057
          %v2059 = vpop.f32.mrb[0].mxu0
          %v2060 = vpop.f32.mrb[0].mxu0
          %v2061 = vpop.f32.mrb[0].mxu0
          %2062 = vdwg.mxu0
          %v2063 = vtanh.pop %v2058
          %2064 = vst [vmem:[#allocation10] sm:$0x3] %v2063
        $region112: #{_lambda_.1} parent=91 // pred_fallthru
          _
        // Predicated region
        $region113: #{_lambda_.1} parent=91 // pred_check
          %p2065 = pneg %p487
        $region114: #{_lambda_.1} parent=91 // pred_check_branch
          %2067 = sbr.rel (%p2065) target = $region116
        $region115: #{_lambda_.1} parent=91 // pred_region
          %s2069 = ssub.s32 32, 32
          %2070 = vsyncadd [#allocation6], %s2069
          %s2072 = sshll.u32 [#allocation10], 4
          %s2073 = int_to_ptr.vmem [resolvable:$true] %s2072
          %2075 = dma.vmem_to_hbm [thread:$0]  %s2073, 32, %s18, [#allocation6]
        $region116: #{_lambda_.1} parent=91 // pred_fallthru
          _
        // Predicated region
        $region117: #{_lambda_.1} parent=91 // pred_check
          %p2076 = pneg %p487
        $region118: #{_lambda_.1} parent=91 // pred_check_branch
          %2078 = sbr.rel (%p2076) target = $region120
        $region119: #{_lambda_.1} parent=91 // pred_region
          %2079 = dma.done [#allocation6], 32
        $region120: #{_lambda_.1} parent=91 // pred_fallthru
          _
      $region92: #{_lambda_.1} parent=5 // pred_fallthru
        _
      %p2080 = scmp.le.s32.totalorder 2, %s31
      // Predicated region
      $region121: #{_lambda_.1} parent=5 // pred_check
        %p2081 = pneg %p2080
      $region122: #{_lambda_.1} parent=5 // pred_check_branch
        %2083 = sbr.rel (%p2081) target = $region124
      $region123: #{_lambda_.1} parent=5 // pred_region
        %s2084 = ssub.s32 %s31, 2
      $region124: #{_lambda_.1} parent=5 // pred_fallthru
        _
    $region6: #{_lambda_.1} parent=1 // loop_footer
      %s35 = sadd.s32 1, %s31
    $region7: #{_lambda_.1} parent=1 // loop_footer_branch
      %30 = sbr.rel target = $region3
    $region8: #{_lambda_.1} parent=1 // loop_exit
      _
    %2085 = vsyncpa [#allocation5], 1
    %s2086 = scalar_lea.sflag [#allocation5], 1
    %2087 = vsyncpa %s2086, 1
    %2088 = vsyncpa [#allocation8], 1
    %s2089 = scalar_lea.sflag [#allocation8], 1
    %2090 = vsyncpa %s2089, 1
    %2091 = vsyncpa [#allocation6], 1
    %s2092 = scalar_lea.sflag [#allocation6], 1
    %2093 = vsyncpa %s2092, 1

</llo_original>
